<compile_context>
chip_gen: v7x
topology: tpu7x:2x2x1
jax: 0.10.0
libtpu: 0.0.40
codegen_flags: <defaults>
</compile_context>

<pallas_src>
import math
import functools

import numpy as np
import jax
import jax.numpy as jnp
from jax.experimental import pallas as pl
from jax.experimental.pallas import tpu as pltpu


# ----------------------------- encoder layer kernel ------------------------- #

def _encoder_layer_kernel(
    x_ref,
    wqkv_ref, bqkv_ref, wo_ref, bo_ref,
    w1_ref, b1_ref, w2_ref, b2_ref,
    g1_ref, be1_ref, g2_ref, be2_ref,
    out_ref,
    ctx_ref,
    *, h, dh, eps,
):
    D = h * dh
    x = x_ref[0]                                     # (L, D) f32
    xb = x.astype(jnp.bfloat16)

    # ---- fused Q|K|V projection: one MXU pass with a (D, 3D) RHS ----
    # 1/sqrt(d_k) is already folded into the q columns of wqkv/bqkv.
    qkv = jnp.dot(xb, wqkv_ref[...],
                  preferred_element_type=jnp.float32) + bqkv_ref[...]
    qkvb = qkv.astype(jnp.bfloat16)                  # (L, 3D)

    # ---- per-head attention into the f32 context scratch ----
    # Each head writes its dh-wide lane slice of ctx_ref, so the (L, L)
    # softmax temporaries die inside the iteration and the output projection
    # below is a single K=D contraction.
    # TODO(synk): for large h (8-16) convert this to lax.fori_loop over heads;
    # that needs dynamic 64-lane-offset ref slicing (a Mosaic relayout risk),
    # so the statically unrolled form is kept here.
    for hh in range(h):
        q_sl = slice(hh * dh, (hh + 1) * dh)
        k_sl = slice(D + hh * dh, D + (hh + 1) * dh)
        v_sl = slice(2 * D + hh * dh, 2 * D + (hh + 1) * dh)

        qh = qkvb[:, q_sl]                           # (L, dh) bf16, pre-scaled
        kh = qkvb[:, k_sl]
        vh = qkvb[:, v_sl]

        # Q @ K^T: contract the feature dim directly (no explicit transpose).
        logits = jax.lax.dot_general(
            qh, kh, (((1,), (1,)), ((), ())),
            preferred_element_type=jnp.float32)      # (L, L) f32

        logits = logits - jnp.max(logits, axis=-1, keepdims=True)
        p = jnp.exp(logits)
        att = p * pl.reciprocal(jnp.sum(p, axis=-1, keepdims=True), approx=True)

        ctx_ref[:, q_sl] = jnp.dot(att.astype(jnp.bfloat16), vh,
                                   preferred_element_type=jnp.float32)

    # ---- single output projection over the whole context (K = D) ----
    attn_out = jnp.dot(ctx_ref[...].astype(jnp.bfloat16), wo_ref[...],
                       preferred_element_type=jnp.float32) + bo_ref[...]

    # ---- residual + LayerNorm 1 (f32) ----
    y1 = attn_out + x
    mu1 = jnp.mean(y1, axis=-1, keepdims=True)
    var1 = jnp.mean((y1 - mu1) ** 2, axis=-1, keepdims=True)
    out1 = (y1 - mu1) * jax.lax.rsqrt(var1 + eps) * g1_ref[...] + be1_ref[...]

    # ---- FFN: relu(out1 @ W1 + b1) @ W2 + b2 (hidden width 128-lane padded) ----
    ffn = jnp.dot(out1.astype(jnp.bfloat16), w1_ref[...],
                  preferred_element_type=jnp.float32) + b1_ref[...]
    ffn = jnp.maximum(ffn, 0.0)
    ffn = jnp.dot(ffn.astype(jnp.bfloat16), w2_ref[...],
                  preferred_element_type=jnp.float32) + b2_ref[...]

    # ---- residual + LayerNorm 2 (f32) ----
    y2 = out1 + ffn
    mu2 = jnp.mean(y2, axis=-1, keepdims=True)
    var2 = jnp.mean((y2 - mu2) ** 2, axis=-1, keepdims=True)
    out_ref[0] = (y2 - mu2) * jax.lax.rsqrt(var2 + eps) * g2_ref[...] + be2_ref[...]


def _vmem_cap_bytes():
    """Per-generation scoped-VMEM cap (leave headroom for Mosaic scratch and
    the double-buffered (1,L,D) in/out blocks)."""
    phys = 128 * 2**20
    try:
        info = pltpu.get_tpu_info()
        phys = int(getattr(info, "vmem_capacity_bytes", phys))
    except Exception:
        pass
    # ~54 MiB on v7x (64 MiB physical), ~108 MiB on v5e/v6e (128 MiB physical)
    return int(phys * 0.85)


def encoder_layer_pallas(x, lp, *, h, eps=1e-6):
    B, L, D = x.shape
    assert D % h == 0
    dh = D // h
    dffp = lp["w1"].shape[1]                 # padded FFN hidden width (128-mult)

    args = (
        x,
        lp["wqkv"], lp["bqkv"], lp["wo"], lp["bo"],
        lp["w1"], lp["b1"], lp["w2"], lp["b2"],
        lp["g1"], lp["be1"], lp["g2"], lp["be2"],
    )

    kernel = functools.partial(_encoder_layer_kernel, h=h, dh=dh, eps=eps)

    weight_bytes = (2 * (D * 3 * D + D * D + 2 * D * dffp)
                    + 4 * (3 * D + D + dffp + D + 4 * D))
    act_bytes = 4 * (8 * L * D + 3 * L * L + 2 * L * dffp)
    vmem_limit = int(min(_vmem_cap_bytes(),
                         max(32 * 2**20, 2 * (weight_bytes + act_bytes))))

    cost = pl.CostEstimate(
        flops=int(B * (2 * L * D * (4 * D + 2 * dffp) + 4 * h * L * L * dh)),
        transcendentals=int(B * (h * L * L + h * L + 2 * L)),
        bytes_accessed=int(2 * B * L * D * 4 + weight_bytes),
    )

    weight_shapes = (
        (D, 3 * D), (1, 3 * D), (D, D), (1, D),
        (D, dffp), (1, dffp), (dffp, D), (1, D),
        (1, D), (1, D), (1, D), (1, D),
    )
    # Weights have a constant index_map, so Pallas fetches each block once per
    # call and keeps it resident across the batch grid.
    in_specs = ([pl.BlockSpec((1, L, D), lambda b: (b, 0, 0))]
                + [pl.BlockSpec(s, lambda b: (0, 0)) for s in weight_shapes])

    return pl.pallas_call(
        kernel,
        out_shape=jax.ShapeDtypeStruct((B, L, D), x.dtype),
        grid=(B,),
        in_specs=in_specs,
        out_specs=pl.BlockSpec((1, L, D), lambda b: (b, 0, 0)),
        scratch_shapes=[pltpu.VMEM((L, D), jnp.float32)],
        compiler_params=pltpu.CompilerParams(
            dimension_semantics=("parallel",),
            vmem_limit_bytes=vmem_limit),
        cost_estimate=cost,
    )(*args)


# --------------------------- one-time weight packing ------------------------ #

def prepare_encoder_params(params):
    """One-time prep: bf16 weight cast, QKV fusion, 1/sqrt(d_k) folded into
    wq/bq, sqrt(d_model) folded into the embedding table, FFN hidden width
    zero-padded to a multiple of 128 lanes."""
    emb = jnp.asarray(params["emb"], jnp.float32)
    pos = jnp.asarray(params["pos"], jnp.float32)
    D = emb.shape[1]
    h = D // 64                              # matches the reference: h = d_model // 64
    dh = D // h
    qscale = 1.0 / math.sqrt(dh)
    bf16 = jnp.bfloat16

    layers = []
    for lp in params["layers"]:
        dff = lp["w1"].shape[1]
        dffp = max(128, ((dff + 127) // 128) * 128)
        pad = dffp - dff
        wqkv = jnp.concatenate(
            [lp["wq"] * qscale, lp["wk"], lp["wv"]], axis=1).astype(bf16)
        bqkv = jnp.concatenate(
            [lp["bq"] * qscale, lp["bk"], lp["bv"]], axis=1).astype(jnp.float32)
        layers.append(dict(
            wqkv=wqkv, bqkv=bqkv,
            wo=lp["wo"].astype(bf16), bo=jnp.asarray(lp["bo"], jnp.float32),
            w1=jnp.pad(lp["w1"], ((0, 0), (0, pad))).astype(bf16),
            b1=jnp.pad(lp["b1"], ((0, 0), (0, pad))).astype(jnp.float32),
            w2=jnp.pad(lp["w2"], ((0, pad), (0, 0))).astype(bf16),
            b2=jnp.asarray(lp["b2"], jnp.float32),
            g1=jnp.asarray(lp["g1"], jnp.float32),
            be1=jnp.asarray(lp["be1"], jnp.float32),
            g2=jnp.asarray(lp["g2"], jnp.float32),
            be2=jnp.asarray(lp["be2"], jnp.float32),
        ))
    return dict(emb_scaled=emb * math.sqrt(D), pos=pos, h=h, layers=layers)


# ------------------------------- full Encoder ------------------------------- #

def encoder_forward(tokens, prepared, *, eps=1e-6):
    """tokens: (B, L) int32 -> (B, L, D) float32."""
    emb_scaled, pos = prepared["emb_scaled"], prepared["pos"]
    B, L = tokens.shape
    # Embedding gather + (pre-folded) sqrt(d_model) scale + positional add in
    # plain JAX: XLA fuses it into the gather; a standalone elementwise
    # pallas_call would only add an extra HBM round trip.
    # TODO(synk): dropout after the positional encoding is identity (inference).
    x = jnp.take(emb_scaled, tokens, axis=0) + pos[:L][None]
    for lp in prepared["layers"]:
        x = encoder_layer_pallas(x, lp, h=prepared["h"], eps=eps)
    return x


# --------------------------- pure-JAX f32 reference ------------------------- #

def encoder_ref(tokens, params, *, eps=1e-6):
    emb, pos = params["emb"], params["pos"]
    B, L = tokens.shape
    D = emb.shape[1]
    h = D // 64
    dh = D // h

    x = emb[tokens] * math.sqrt(D) + pos[:L][None]

    def ln(y, g, b):
        mu = y.mean(-1, keepdims=True)
        var = ((y - mu) ** 2).mean(-1, keepdims=True)
        return (y - mu) / jnp.sqrt(var + eps) * g + b

    for lp in params["layers"]:
        def split(t):
            return t.reshape(B, L, h, dh).transpose(0, 2, 1, 3)   # (B, h, L, dh)

        q = split(x @ lp["wq"] + lp["bq"])
        k = split(x @ lp["wk"] + lp["bk"])
        v = split(x @ lp["wv"] + lp["bv"])

        scores = jnp.einsum("bhld,bhmd->bhlm", q, k) / math.sqrt(dh)
        w = jax.nn.softmax(scores, axis=-1)
        attn = jnp.einsum("bhlm,bhmd->bhld", w, v)
        attn = attn.transpose(0, 2, 1, 3).reshape(B, L, D)
        attn = attn @ lp["wo"] + lp["bo"]

        out1 = ln(attn + x, lp["g1"], lp["be1"])
        ffn = jax.nn.relu(out1 @ lp["w1"] + lp["b1"]) @ lp["w2"] + lp["b2"]
        x = ln(out1 + ffn, lp["g2"], lp["be2"])
    return x


# ----------------------------------- main ------------------------------------ #

if __name__ == "__main__":
    B, L, D, VOCAB, NUM_LAYERS, MAX_LEN, PAD = 2, 8, 128, 40, 2, 32, 0

    key = jax.random.PRNGKey(0)
    key, k_emb, k_tok = jax.random.split(key, 3)

    # embedding table; padding_idx row is zero (as in nn.Embedding(padding_idx=...))
    emb = 0.02 * jax.random.normal(k_emb, (VOCAB, D), jnp.float32)
    emb = emb.at[PAD].set(0.0)

    # exact DynamicPositionEmbedding sinusoid table
    pos = np.array(
        [[math.sin(p * math.exp(-math.log(10000.0) * i / D)
                   * math.exp(math.log(10000.0) / D * (i % 2))
                   + 0.5 * math.pi * (i % 2))
          for i in range(D)] for p in range(MAX_LEN)], dtype=np.float32)

    def linear(kw, kb, din, dout):
        return (0.05 * jax.random.normal(kw, (din, dout), jnp.float32),
                0.05 * jax.random.normal(kb, (1, dout), jnp.float32))

    layers = []
    for _ in range(NUM_LAYERS):
        key, *ks = jax.random.split(key, 13)
        wq, bq = linear(ks[0], ks[1], D, D)
        wk, bk = linear(ks[2], ks[3], D, D)
        wv, bv = linear(ks[4], ks[5], D, D)
        wo, bo = linear(ks[6], ks[7], D, D)
        w1, b1 = linear(ks[8], ks[9], D, D // 2)     # FFN_pre: d_model -> d_model // 2
        w2, b2 = linear(ks[10], ks[11], D // 2, D)   # FFN_suf: d_model // 2 -> d_model
        layers.append(dict(
            wq=wq, bq=bq, wk=wk, bk=bk, wv=wv, bv=bv, wo=wo, bo=bo,
            w1=w1, b1=b1, w2=w2, b2=b2,
            g1=jnp.ones((1, D), jnp.float32), be1=jnp.zeros((1, D), jnp.float32),
            g2=jnp.ones((1, D), jnp.float32), be2=jnp.zeros((1, D), jnp.float32)))

    params = dict(emb=emb, pos=jnp.asarray(pos), layers=layers)
    tokens = jax.random.randint(k_tok, (B, L), 0, VOCAB, dtype=jnp.int32)

    prepared = prepare_encoder_params(params)        # one-time bf16 packing
    out = encoder_forward(tokens, prepared)
    out = jax.block_until_ready(out)

    ref = encoder_ref(tokens, params)
    assert out.shape == (B, L, D)
    max_err = float(jnp.max(jnp.abs(out - ref)))
    # bf16 MXU operands (f32 accumulation) vs a pure-f32 reference: relaxed tol.
    assert jnp.allclose(out, ref, atol=5e-2, rtol=5e-2), \
        f"mismatch vs pure-JAX reference (max abs err = {max_err})"

    print("KERNEL_OK")
</pallas_src>

<mosaic_0001>
module attributes {stable_mosaic.version = 11 : i64} {
  func.func @_encoder_layer_kernel(%arg0: i32, %arg1: memref<1x8x128xf32, #tpu.memory_space<vmem>>, %arg2: memref<128x384xbf16, #tpu.memory_space<vmem>>, %arg3: memref<1x384xf32, #tpu.memory_space<vmem>>, %arg4: memref<128x128xbf16, #tpu.memory_space<vmem>>, %arg5: memref<1x128xf32, #tpu.memory_space<vmem>>, %arg6: memref<128x128xbf16, #tpu.memory_space<vmem>>, %arg7: memref<1x128xf32, #tpu.memory_space<vmem>>, %arg8: memref<128x128xbf16, #tpu.memory_space<vmem>>, %arg9: memref<1x128xf32, #tpu.memory_space<vmem>>, %arg10: memref<1x128xf32, #tpu.memory_space<vmem>>, %arg11: memref<1x128xf32, #tpu.memory_space<vmem>>, %arg12: memref<1x128xf32, #tpu.memory_space<vmem>>, %arg13: memref<1x128xf32, #tpu.memory_space<vmem>>, %arg14: memref<1x8x128xf32, #tpu.memory_space<vmem>>, %arg15: memref<8x128xf32, #tpu.memory_space<vmem>>) attributes {dimension_semantics = [#tpu.dimension_semantics<parallel>], iteration_bounds = array<i64: 2>, scalar_prefetch = 0 : i64, scratch_operands = 1 : i64, tpu.core_type = #tpu.core_type<tc>, window_params = [{transform_indices = @transform_0, window_bounds = array<i64: 1, 8, 128>}, {pipeline_mode = #tpu.pipeline_mode<synchronous>, transform_indices = @transform_1, window_bounds = array<i64: 128, 384>}, {pipeline_mode = #tpu.pipeline_mode<synchronous>, transform_indices = @transform_2, window_bounds = array<i64: 1, 384>}, {pipeline_mode = #tpu.pipeline_mode<synchronous>, transform_indices = @transform_3, window_bounds = array<i64: 128, 128>}, {pipeline_mode = #tpu.pipeline_mode<synchronous>, transform_indices = @transform_4, window_bounds = array<i64: 1, 128>}, {pipeline_mode = #tpu.pipeline_mode<synchronous>, transform_indices = @transform_5, window_bounds = array<i64: 128, 128>}, {pipeline_mode = #tpu.pipeline_mode<synchronous>, transform_indices = @transform_6, window_bounds = array<i64: 1, 128>}, {pipeline_mode = #tpu.pipeline_mode<synchronous>, transform_indices = @transform_7, window_bounds = array<i64: 128, 128>}, {pipeline_mode = #tpu.pipeline_mode<synchronous>, transform_indices = @transform_8, window_bounds = array<i64: 1, 128>}, {pipeline_mode = #tpu.pipeline_mode<synchronous>, transform_indices = @transform_9, window_bounds = array<i64: 1, 128>}, {pipeline_mode = #tpu.pipeline_mode<synchronous>, transform_indices = @transform_10, window_bounds = array<i64: 1, 128>}, {pipeline_mode = #tpu.pipeline_mode<synchronous>, transform_indices = @transform_11, window_bounds = array<i64: 1, 128>}, {pipeline_mode = #tpu.pipeline_mode<synchronous>, transform_indices = @transform_12, window_bounds = array<i64: 1, 128>}, {transform_indices = @transform_13, window_bounds = array<i64: 1, 8, 128>}]} {
    %c0 = arith.constant 0 : index
    %c0_0 = arith.constant 0 : index
    %c0_1 = arith.constant 0 : index
    %0 = vector.load %arg1[%c0, %c0_0, %c0_1] : memref<1x8x128xf32, #tpu.memory_space<vmem>>, vector<1x8x128xf32>
    %1 = vector.shape_cast %0 : vector<1x8x128xf32> to vector<8x128xf32>
    %2 = arith.truncf %1 : vector<8x128xf32> to vector<8x128xbf16>
    %c0_2 = arith.constant 0 : index
    %c0_3 = arith.constant 0 : index
    %3 = vector.load %arg2[%c0_2, %c0_3] : memref<128x384xbf16, #tpu.memory_space<vmem>>, vector<128x384xbf16>
    %cst = arith.constant dense<0.000000e+00> : vector<8x384xf32>
    %4 = tpu.matmul %2, %3, %cst {dimension_numbers = #tpu.dot_dimension_numbers<[1], [0], [0], [1], [0, 0, 1, 1], [], []>} : vector<8x128xbf16>, vector<128x384xbf16>, vector<8x384xf32> -> vector<8x384xf32>
    %c0_4 = arith.constant 0 : index
    %c0_5 = arith.constant 0 : index
    %5 = vector.load %arg3[%c0_4, %c0_5] : memref<1x384xf32, #tpu.memory_space<vmem>>, vector<1x384xf32>
    %6 = vector.broadcast %5 : vector<1x384xf32> to vector<8x384xf32>
    %7 = arith.addf %4, %6 : vector<8x384xf32>
    %8 = arith.truncf %7 : vector<8x384xf32> to vector<8x384xbf16>
    %9 = vector.extract_strided_slice %8 {offsets = [0, 0], sizes = [8, 64], strides = [1, 1]} : vector<8x384xbf16> to vector<8x64xbf16>
    %10 = vector.extract_strided_slice %8 {offsets = [0, 128], sizes = [8, 64], strides = [1, 1]} : vector<8x384xbf16> to vector<8x64xbf16>
    %11 = vector.extract_strided_slice %8 {offsets = [0, 256], sizes = [8, 64], strides = [1, 1]} : vector<8x384xbf16> to vector<8x64xbf16>
    %cst_6 = arith.constant dense<0.000000e+00> : vector<8x8xf32>
    %12 = tpu.matmul %9, %10, %cst_6 {dimension_numbers = #tpu.dot_dimension_numbers<[1], [1], [0], [0], [0, 0, 1, 0], [], []>} : vector<8x64xbf16>, vector<8x64xbf16>, vector<8x8xf32> -> vector<8x8xf32>
    %cst_7 = arith.constant dense<0xFF800000> : vector<8xf32>
    %13 = vector.multi_reduction <maximumf>, %12, %cst_7 [1] : vector<8x8xf32> to vector<8xf32>
    %14 = vector.shape_cast %13 : vector<8xf32> to vector<8x1xf32>
    %15 = vector.broadcast %14 : vector<8x1xf32> to vector<8x8xf32>
    %16 = arith.subf %12, %15 : vector<8x8xf32>
    %17 = math.exp %16 : vector<8x8xf32>
    %cst_8 = arith.constant dense<0.000000e+00> : vector<8xf32>
    %18 = vector.multi_reduction <add>, %17, %cst_8 [1] : vector<8x8xf32> to vector<8xf32>
    %19 = vector.shape_cast %18 : vector<8xf32> to vector<8x1xf32>
    %20 = tpu.reciprocal %19 {approx = true} : vector<8x1xf32> -> vector<8x1xf32>
    %21 = vector.broadcast %20 : vector<8x1xf32> to vector<8x8xf32>
    %22 = arith.mulf %17, %21 : vector<8x8xf32>
    %23 = arith.truncf %22 : vector<8x8xf32> to vector<8x8xbf16>
    %cst_9 = arith.constant dense<0.000000e+00> : vector<8x64xf32>
    %24 = tpu.matmul %23, %11, %cst_9 {dimension_numbers = #tpu.dot_dimension_numbers<[1], [0], [0], [1], [0, 0, 1, 1], [], []>} : vector<8x8xbf16>, vector<8x64xbf16>, vector<8x64xf32> -> vector<8x64xf32>
    %c0_10 = arith.constant 0 : index
    %c0_11 = arith.constant 0 : index
    %25 = vector.load %arg15[%c0_10, %c0_11] : memref<8x128xf32, #tpu.memory_space<vmem>>, vector<8x64xf32>
    tpu.vector_store %arg15[%c0_10, %c0_11], %24 {strides = array<i32>} : memref<8x128xf32, #tpu.memory_space<vmem>>, vector<8x64xf32>,
    %26 = vector.extract_strided_slice %8 {offsets = [0, 64], sizes = [8, 64], strides = [1, 1]} : vector<8x384xbf16> to vector<8x64xbf16>
    %27 = vector.extract_strided_slice %8 {offsets = [0, 192], sizes = [8, 64], strides = [1, 1]} : vector<8x384xbf16> to vector<8x64xbf16>
    %28 = vector.extract_strided_slice %8 {offsets = [0, 320], sizes = [8, 64], strides = [1, 1]} : vector<8x384xbf16> to vector<8x64xbf16>
    %cst_12 = arith.constant dense<0.000000e+00> : vector<8x8xf32>
    %29 = tpu.matmul %26, %27, %cst_12 {dimension_numbers = #tpu.dot_dimension_numbers<[1], [1], [0], [0], [0, 0, 1, 0], [], []>} : vector<8x64xbf16>, vector<8x64xbf16>, vector<8x8xf32> -> vector<8x8xf32>
    %cst_13 = arith.constant dense<0xFF800000> : vector<8xf32>
    %30 = vector.multi_reduction <maximumf>, %29, %cst_13 [1] : vector<8x8xf32> to vector<8xf32>
    %31 = vector.shape_cast %30 : vector<8xf32> to vector<8x1xf32>
    %32 = vector.broadcast %31 : vector<8x1xf32> to vector<8x8xf32>
    %33 = arith.subf %29, %32 : vector<8x8xf32>
    %34 = math.exp %33 : vector<8x8xf32>
    %cst_14 = arith.constant dense<0.000000e+00> : vector<8xf32>
    %35 = vector.multi_reduction <add>, %34, %cst_14 [1] : vector<8x8xf32> to vector<8xf32>
    %36 = vector.shape_cast %35 : vector<8xf32> to vector<8x1xf32>
    %37 = tpu.reciprocal %36 {approx = true} : vector<8x1xf32> -> vector<8x1xf32>
    %38 = vector.broadcast %37 : vector<8x1xf32> to vector<8x8xf32>
    %39 = arith.mulf %34, %38 : vector<8x8xf32>
    %40 = arith.truncf %39 : vector<8x8xf32> to vector<8x8xbf16>
    %cst_15 = arith.constant dense<0.000000e+00> : vector<8x64xf32>
    %41 = tpu.matmul %40, %28, %cst_15 {dimension_numbers = #tpu.dot_dimension_numbers<[1], [0], [0], [1], [0, 0, 1, 1], [], []>} : vector<8x8xbf16>, vector<8x64xbf16>, vector<8x64xf32> -> vector<8x64xf32>
    %c0_16 = arith.constant 0 : index
    %c64 = arith.constant 64 : index
    %42 = vector.load %arg15[%c0_16, %c64] : memref<8x128xf32, #tpu.memory_space<vmem>>, vector<8x64xf32>
    tpu.vector_store %arg15[%c0_16, %c64], %41 {strides = array<i32>} : memref<8x128xf32, #tpu.memory_space<vmem>>, vector<8x64xf32>,
    %c0_17 = arith.constant 0 : index
    %c0_18 = arith.constant 0 : index
    %43 = vector.load %arg15[%c0_17, %c0_18] : memref<8x128xf32, #tpu.memory_space<vmem>>, vector<8x128xf32>
    %44 = arith.truncf %43 : vector<8x128xf32> to vector<8x128xbf16>
    %c0_19 = arith.constant 0 : index
    %c0_20 = arith.constant 0 : index
    %45 = vector.load %arg4[%c0_19, %c0_20] : memref<128x128xbf16, #tpu.memory_space<vmem>>, vector<128x128xbf16>
    %cst_21 = arith.constant dense<0.000000e+00> : vector<8x128xf32>
    %46 = tpu.matmul %44, %45, %cst_21 {dimension_numbers = #tpu.dot_dimension_numbers<[1], [0], [0], [1], [0, 0, 1, 1], [], []>} : vector<8x128xbf16>, vector<128x128xbf16>, vector<8x128xf32> -> vector<8x128xf32>
    %c0_22 = arith.constant 0 : index
    %c0_23 = arith.constant 0 : index
    %47 = vector.load %arg5[%c0_22, %c0_23] : memref<1x128xf32, #tpu.memory_space<vmem>>, vector<1x128xf32>
    %48 = vector.broadcast %47 : vector<1x128xf32> to vector<8x128xf32>
    %49 = arith.addf %46, %48 : vector<8x128xf32>
    %50 = arith.addf %49, %1 : vector<8x128xf32>
    %cst_24 = arith.constant dense<0.000000e+00> : vector<8xf32>
    %51 = vector.multi_reduction <add>, %50, %cst_24 [1] : vector<8x128xf32> to vector<8xf32>
    %52 = vector.shape_cast %51 : vector<8xf32> to vector<8x1xf32>
    %cst_25 = arith.constant 1.280000e+02 : f32
    %53 = vector.broadcast %cst_25 : f32 to vector<8x1xf32>
    %54 = arith.divf %52, %53 : vector<8x1xf32>
    %55 = vector.broadcast %54 : vector<8x1xf32> to vector<8x128xf32>
    %56 = arith.subf %50, %55 : vector<8x128xf32>
    %57 = arith.mulf %56, %56 : vector<8x128xf32>
    %cst_26 = arith.constant dense<0.000000e+00> : vector<8xf32>
    %58 = vector.multi_reduction <add>, %57, %cst_26 [1] : vector<8x128xf32> to vector<8xf32>
    %59 = vector.shape_cast %58 : vector<8xf32> to vector<8x1xf32>
    %cst_27 = arith.constant 1.280000e+02 : f32
    %60 = vector.broadcast %cst_27 : f32 to vector<8x1xf32>
    %61 = arith.divf %59, %60 : vector<8x1xf32>
    %62 = vector.broadcast %54 : vector<8x1xf32> to vector<8x128xf32>
    %63 = arith.subf %50, %62 : vector<8x128xf32>
    %cst_28 = arith.constant 9.99999997E-7 : f32
    %64 = vector.broadcast %cst_28 : f32 to vector<8x1xf32>
    %65 = arith.addf %61, %64 : vector<8x1xf32>
    %66 = math.rsqrt %65 : vector<8x1xf32>
    %67 = vector.broadcast %66 : vector<8x1xf32> to vector<8x128xf32>
    %68 = arith.mulf %63, %67 : vector<8x128xf32>
    %c0_29 = arith.constant 0 : index
    %c0_30 = arith.constant 0 : index
    %69 = vector.load %arg10[%c0_29, %c0_30] : memref<1x128xf32, #tpu.memory_space<vmem>>, vector<1x128xf32>
    %70 = vector.broadcast %69 : vector<1x128xf32> to vector<8x128xf32>
    %71 = arith.mulf %68, %70 : vector<8x128xf32>
    %c0_31 = arith.constant 0 : index
    %c0_32 = arith.constant 0 : index
    %72 = vector.load %arg11[%c0_31, %c0_32] : memref<1x128xf32, #tpu.memory_space<vmem>>, vector<1x128xf32>
    %73 = vector.broadcast %72 : vector<1x128xf32> to vector<8x128xf32>
    %74 = arith.addf %71, %73 : vector<8x128xf32>
    %75 = arith.truncf %74 : vector<8x128xf32> to vector<8x128xbf16>
    %c0_33 = arith.constant 0 : index
    %c0_34 = arith.constant 0 : index
    %76 = vector.load %arg6[%c0_33, %c0_34] : memref<128x128xbf16, #tpu.memory_space<vmem>>, vector<128x128xbf16>
    %cst_35 = arith.constant dense<0.000000e+00> : vector<8x128xf32>
    %77 = tpu.matmul %75, %76, %cst_35 {dimension_numbers = #tpu.dot_dimension_numbers<[1], [0], [0], [1], [0, 0, 1, 1], [], []>} : vector<8x128xbf16>, vector<128x128xbf16>, vector<8x128xf32> -> vector<8x128xf32>
    %c0_36 = arith.constant 0 : index
    %c0_37 = arith.constant 0 : index
    %78 = vector.load %arg7[%c0_36, %c0_37] : memref<1x128xf32, #tpu.memory_space<vmem>>, vector<1x128xf32>
    %79 = vector.broadcast %78 : vector<1x128xf32> to vector<8x128xf32>
    %80 = arith.addf %77, %79 : vector<8x128xf32>
    %cst_38 = arith.constant 0.000000e+00 : f32
    %81 = vector.broadcast %cst_38 : f32 to vector<8x128xf32>
    %82 = arith.maximumf %80, %81 : vector<8x128xf32>
    %83 = arith.truncf %82 : vector<8x128xf32> to vector<8x128xbf16>
    %c0_39 = arith.constant 0 : index
    %c0_40 = arith.constant 0 : index
    %84 = vector.load %arg8[%c0_39, %c0_40] : memref<128x128xbf16, #tpu.memory_space<vmem>>, vector<128x128xbf16>
    %cst_41 = arith.constant dense<0.000000e+00> : vector<8x128xf32>
    %85 = tpu.matmul %83, %84, %cst_41 {dimension_numbers = #tpu.dot_dimension_numbers<[1], [0], [0], [1], [0, 0, 1, 1], [], []>} : vector<8x128xbf16>, vector<128x128xbf16>, vector<8x128xf32> -> vector<8x128xf32>
    %c0_42 = arith.constant 0 : index
    %c0_43 = arith.constant 0 : index
    %86 = vector.load %arg9[%c0_42, %c0_43] : memref<1x128xf32, #tpu.memory_space<vmem>>, vector<1x128xf32>
    %87 = vector.broadcast %86 : vector<1x128xf32> to vector<8x128xf32>
    %88 = arith.addf %85, %87 : vector<8x128xf32>
    %89 = arith.addf %74, %88 : vector<8x128xf32>
    %cst_44 = arith.constant dense<0.000000e+00> : vector<8xf32>
    %90 = vector.multi_reduction <add>, %89, %cst_44 [1] : vector<8x128xf32> to vector<8xf32>
    %91 = vector.shape_cast %90 : vector<8xf32> to vector<8x1xf32>
    %cst_45 = arith.constant 1.280000e+02 : f32
    %92 = vector.broadcast %cst_45 : f32 to vector<8x1xf32>
    %93 = arith.divf %91, %92 : vector<8x1xf32>
    %94 = vector.broadcast %93 : vector<8x1xf32> to vector<8x128xf32>
    %95 = arith.subf %89, %94 : vector<8x128xf32>
    %96 = arith.mulf %95, %95 : vector<8x128xf32>
    %cst_46 = arith.constant dense<0.000000e+00> : vector<8xf32>
    %97 = vector.multi_reduction <add>, %96, %cst_46 [1] : vector<8x128xf32> to vector<8xf32>
    %98 = vector.shape_cast %97 : vector<8xf32> to vector<8x1xf32>
    %cst_47 = arith.constant 1.280000e+02 : f32
    %99 = vector.broadcast %cst_47 : f32 to vector<8x1xf32>
    %100 = arith.divf %98, %99 : vector<8x1xf32>
    %101 = vector.broadcast %93 : vector<8x1xf32> to vector<8x128xf32>
    %102 = arith.subf %89, %101 : vector<8x128xf32>
    %cst_48 = arith.constant 9.99999997E-7 : f32
    %103 = vector.broadcast %cst_48 : f32 to vector<8x1xf32>
    %104 = arith.addf %100, %103 : vector<8x1xf32>
    %105 = math.rsqrt %104 : vector<8x1xf32>
    %106 = vector.broadcast %105 : vector<8x1xf32> to vector<8x128xf32>
    %107 = arith.mulf %102, %106 : vector<8x128xf32>
    %c0_49 = arith.constant 0 : index
    %c0_50 = arith.constant 0 : index
    %108 = vector.load %arg12[%c0_49, %c0_50] : memref<1x128xf32, #tpu.memory_space<vmem>>, vector<1x128xf32>
    %109 = vector.broadcast %108 : vector<1x128xf32> to vector<8x128xf32>
    %110 = arith.mulf %107, %109 : vector<8x128xf32>
    %c0_51 = arith.constant 0 : index
    %c0_52 = arith.constant 0 : index
    %111 = vector.load %arg13[%c0_51, %c0_52] : memref<1x128xf32, #tpu.memory_space<vmem>>, vector<1x128xf32>
    %112 = vector.broadcast %111 : vector<1x128xf32> to vector<8x128xf32>
    %113 = arith.addf %110, %112 : vector<8x128xf32>
    %c0_53 = arith.constant 0 : index
    %c0_54 = arith.constant 0 : index
    %c0_55 = arith.constant 0 : index
    %114 = vector.load %arg14[%c0_53, %c0_54, %c0_55] : memref<1x8x128xf32, #tpu.memory_space<vmem>>, vector<1x8x128xf32>
    %115 = vector.shape_cast %114 : vector<1x8x128xf32> to vector<8x128xf32>
    %116 = vector.shape_cast %113 : vector<8x128xf32> to vector<1x8x128xf32>
    tpu.vector_store %arg14[%c0_53, %c0_54, %c0_55], %116 {strides = array<i32>} : memref<1x8x128xf32, #tpu.memory_space<vmem>>, vector<1x8x128xf32>,
    return
  }
  func.func @transform_0(%arg0: i32) -> (i32, i32, i32) {
    %c0_i32 = arith.constant 0 : i32
    %c0_i32_0 = arith.constant 0 : i32
    %c0_i32_1 = arith.constant 0 : i32
    return %arg0, %c0_i32, %c0_i32_0 : i32, i32, i32
  }
  func.func @transform_1(%arg0: i32) -> (i32, i32) {
    %c0_i32 = arith.constant 0 : i32
    %c0_i32_0 = arith.constant 0 : i32
    %c0_i32_1 = arith.constant 0 : i32
    return %c0_i32, %c0_i32_0 : i32, i32
  }
  func.func @transform_2(%arg0: i32) -> (i32, i32) {
    %c0_i32 = arith.constant 0 : i32
    %c0_i32_0 = arith.constant 0 : i32
    %c0_i32_1 = arith.constant 0 : i32
    return %c0_i32, %c0_i32_0 : i32, i32
  }
  func.func @transform_3(%arg0: i32) -> (i32, i32) {
    %c0_i32 = arith.constant 0 : i32
    %c0_i32_0 = arith.constant 0 : i32
    %c0_i32_1 = arith.constant 0 : i32
    return %c0_i32, %c0_i32_0 : i32, i32
  }
  func.func @transform_4(%arg0: i32) -> (i32, i32) {
    %c0_i32 = arith.constant 0 : i32
    %c0_i32_0 = arith.constant 0 : i32
    %c0_i32_1 = arith.constant 0 : i32
    return %c0_i32, %c0_i32_0 : i32, i32
  }
  func.func @transform_5(%arg0: i32) -> (i32, i32) {
    %c0_i32 = arith.constant 0 : i32
    %c0_i32_0 = arith.constant 0 : i32
    %c0_i32_1 = arith.constant 0 : i32
    return %c0_i32, %c0_i32_0 : i32, i32
  }
  func.func @transform_6(%arg0: i32) -> (i32, i32) {
    %c0_i32 = arith.constant 0 : i32
    %c0_i32_0 = arith.constant 0 : i32
    %c0_i32_1 = arith.constant 0 : i32
    return %c0_i32, %c0_i32_0 : i32, i32
  }
  func.func @transform_7(%arg0: i32) -> (i32, i32) {
    %c0_i32 = arith.constant 0 : i32
    %c0_i32_0 = arith.constant 0 : i32
    %c0_i32_1 = arith.constant 0 : i32
    return %c0_i32, %c0_i32_0 : i32, i32
  }
  func.func @transform_8(%arg0: i32) -> (i32, i32) {
    %c0_i32 = arith.constant 0 : i32
    %c0_i32_0 = arith.constant 0 : i32
    %c0_i32_1 = arith.constant 0 : i32
    return %c0_i32, %c0_i32_0 : i32, i32
  }
  func.func @transform_9(%arg0: i32) -> (i32, i32) {
    %c0_i32 = arith.constant 0 : i32
    %c0_i32_0 = arith.constant 0 : i32
    %c0_i32_1 = arith.constant 0 : i32
    return %c0_i32, %c0_i32_0 : i32, i32
  }
  func.func @transform_10(%arg0: i32) -> (i32, i32) {
    %c0_i32 = arith.constant 0 : i32
    %c0_i32_0 = arith.constant 0 : i32
    %c0_i32_1 = arith.constant 0 : i32
    return %c0_i32, %c0_i32_0 : i32, i32
  }
  func.func @transform_11(%arg0: i32) -> (i32, i32) {
    %c0_i32 = arith.constant 0 : i32
    %c0_i32_0 = arith.constant 0 : i32
    %c0_i32_1 = arith.constant 0 : i32
    return %c0_i32, %c0_i32_0 : i32, i32
  }
  func.func @transform_12(%arg0: i32) -> (i32, i32) {
    %c0_i32 = arith.constant 0 : i32
    %c0_i32_0 = arith.constant 0 : i32
    %c0_i32_1 = arith.constant 0 : i32
    return %c0_i32, %c0_i32_0 : i32, i32
  }
  func.func @transform_13(%arg0: i32) -> (i32, i32, i32) {
    %c0_i32 = arith.constant 0 : i32
    %c0_i32_0 = arith.constant 0 : i32
    %c0_i32_1 = arith.constant 0 : i32
    return %arg0, %c0_i32, %c0_i32_0 : i32, i32, i32
  }
}

</mosaic_0001>

<llo_original>
// kernel: tpu_custom_call.1
$region0: #{tpu_custom_call.1}
  #allocation0 [shape = 'u32[]', space=smem, size = 0x4, offset = 0x4, fixed_abs, tag = 'smem constant byte address 0x4 - core index']
  #allocation1 [shape = 'u32[144,128]{1,0:T(1,128)}', space=vmem, size = 0x12000, scoped, tag = 'internal scratch']
  #allocation2 [shape = 'f32[8,128]{1,0:T(8,128)}', space=vmem, size = 0x1000, scoped, tag = 'scratch operand']
  %s0 = inlined_call_operand.hbm [shape: f32[2,8,128], index: 0, kind: input, shape index: {}]
  %s1 = inlined_call_operand.hbm [shape: bf16[128,384], index: 1, kind: input, shape index: {}]
  %s2 = inlined_call_operand.vmem [shape: f32[1,384], index: 2, kind: input, shape index: {}]
  %s3 = inlined_call_operand.hbm [shape: bf16[128,128], index: 3, kind: input, shape index: {}]
  %s4 = inlined_call_operand.vmem [shape: f32[1,128], index: 4, kind: input, shape index: {}]
  %s5 = inlined_call_operand.hbm [shape: bf16[128,128], index: 5, kind: input, shape index: {}]
  %s6 = inlined_call_operand.vmem [shape: f32[1,128], index: 6, kind: input, shape index: {}]
  %s7 = inlined_call_operand.hbm [shape: bf16[128,128], index: 7, kind: input, shape index: {}]
  %s8 = inlined_call_operand.vmem [shape: f32[1,128], index: 8, kind: input, shape index: {}]
  %s9 = inlined_call_operand.vmem [shape: f32[1,128], index: 9, kind: input, shape index: {}]
  %s10 = inlined_call_operand.vmem [shape: f32[1,128], index: 10, kind: input, shape index: {}]
  %s11 = inlined_call_operand.vmem [shape: f32[1,128], index: 11, kind: input, shape index: {}]
  %s12 = inlined_call_operand.vmem [shape: f32[1,128], index: 12, kind: input, shape index: {}]
  %s13 = inlined_call_operand.hbm [shape: f32[2,8,128], index: 13, kind: output, shape index: {}]
  %s14 = sld [smem:[#allocation0]]
  $region105: #{tpu_custom_call.1} parent=0
    _
  %s16 = ssub.s32 1, %s14
  %s17 = scalar_select 0, %s16, %s14
  $region1: #{tpu_custom_call.1} parent=0
    #allocation3 [shape = 'u8[8192]{0}', space=vmem, size = 0x2000, scoped, tag = 'input window, operand 0']
    #allocation4 [shape = 's32[2]{0}', space=sflag, size = 0x8, scoped, tag = 'scoped memory for tpu_custom_call.1']
    #allocation5 [shape = 's32[2]{0}', space=sflag, size = 0x8, scoped, tag = 'scoped memory for tpu_custom_call.1']
    #allocation6 [shape = 'u8[98304]{0}', space=vmem, size = 0x18000, scoped, tag = 'input window, operand 1, single buffered']
    #allocation7 [shape = 's32[1]{0}', space=sflag, size = 0x4, scoped, tag = 'scoped memory for tpu_custom_call.1']
    #allocation8 [shape = 'u8[32768]{0}', space=vmem, size = 0x8000, scoped, tag = 'input window, operand 3, single buffered']
    #allocation9 [shape = 'u8[32768]{0}', space=vmem, size = 0x8000, scoped, tag = 'input window, operand 5, single buffered']
    #allocation10 [shape = 's32[1]{0}', space=sflag, size = 0x4, scoped, tag = 'scoped memory for tpu_custom_call.1']
    #allocation11 [shape = 'u8[32768]{0}', space=vmem, size = 0x8000, scoped, tag = 'input window, operand 7, single buffered']
    #allocation12 [shape = 'u8[8192]{0}', space=vmem, size = 0x2000, scoped, tag = 'output window, operand 0']
    %18 = vsyncpa [#allocation4], 0
    %s19 = scalar_lea.sflag [#allocation4], 1
    %20 = vsyncpa %s19, 0
    %21 = vsyncpa [#allocation7], 0
    %22 = vsyncpa [#allocation10], 0
    %23 = vsyncpa [#allocation5], 0
    %s24 = scalar_lea.sflag [#allocation5], 1
    %25 = vsyncpa %s24, 0
    loop: start=0, step=1, limit=4
    $region2: #{tpu_custom_call.1} parent=1 // loop_pre_header
      _
    $region3: #{tpu_custom_call.1} parent=1 // loop_header
      %s27 = sphi 0, %s31
      %p28 = scmp.ge.s32.totalorder %s27, 4
      %s37 = sphi 0, %s39
      %s40 = sphi 0, %s37
      %s41 = sphi 0, %s40
      %s57 = sphi 0, %s41
      %s61 = sphi 0, %s61
      %s63 = sphi 0, %s61
      %s64 = sphi 0, %s63
      %s78 = sphi 0, %s64
      %s82 = sphi 0, %s82
      %s84 = sphi 0, %s82
      %s85 = sphi 0, %s84
      %s99 = sphi 0, %s85
      %s103 = sphi 0, %s103
      %s105 = sphi 0, %s103
      %s106 = sphi 0, %s105
      %s120 = sphi 0, %s106
      %s124 = sphi 0, %s124
      %s126 = sphi 0, %s124
      %s127 = sphi 0, %s126
      %s141 = sphi 0, %s127
      %s145 = sphi 0, %s145
      %s147 = sphi 0, %s145
      %s148 = sphi 0, %s147
      %s162 = sphi 0, %s148
      %s166 = sphi 0, %s166
      %s168 = sphi 0, %s166
      %s169 = sphi 0, %s168
      %s183 = sphi 0, %s169
      %s187 = sphi 0, %s187
      %s189 = sphi 0, %s187
      %s190 = sphi 0, %s189
      %s204 = sphi 0, %s190
      %s208 = sphi 0, %s208
      %s210 = sphi 0, %s208
      %s211 = sphi 0, %s210
      %s225 = sphi 0, %s211
      %s229 = sphi 0, %s229
      %s231 = sphi 0, %s229
      %s232 = sphi 0, %s231
      %s246 = sphi 0, %s232
      %s250 = sphi 0, %s250
      %s252 = sphi 0, %s250
      %s253 = sphi 0, %s252
      %s267 = sphi 0, %s253
      %s271 = sphi 0, %s271
      %s273 = sphi 0, %s271
      %s274 = sphi 0, %s273
      %s288 = sphi 0, %s274
      %s292 = sphi 0, %s292
      %s294 = sphi 0, %s292
      %s295 = sphi 0, %s294
      %s309 = sphi 0, %s295
      %s315 = sphi 0, %s317
      %s318 = sphi 0, %s315
      %s319 = sphi 0, %s318
      %s335 = sphi 0, %s319
    $region4: #{tpu_custom_call.1} parent=1 // loop_header_branch
      %30 = sbr.rel (%p28) target = $region8
    $region5: #{tpu_custom_call.1} parent=1 // loop_body
      %s32 = ssub.s32 %s27, 1
      %s33 = ssub.s32 %s27, 2
      %s34 = sadd.s32 %s27, 1
      %s35 = ssub.s32 %s27, %s34
      %p36 = scmp.eq.s32.totalorder %s35, 0
      %s38 = sadd.s32 %s37, 1
      %s39 = scalar_select %p36, %s37, %s38
      %p42 = pneg %p36
      %p43 = scmp.eq.s32.totalorder %s27, 1
      %p44 = por %p42, %p43
      %p45 = scmp.ne.s32.totalorder %s37, %s40
      %p46 = scmp.eq.s32.totalorder %s27, 0
      %p47 = por %p45, %p46
      %p48 = scmp.ne.s32.totalorder %s37, %s40
      %p49 = scmp.eq.s32.totalorder %s32, 1
      %p50 = por %p48, %p49
      %p51 = scmp.ne.s32.totalorder %s40, %s41
      %p52 = scmp.eq.s32.totalorder %s32, 0
      %p53 = por %p51, %p52
      %p54 = scmp.ne.s32.totalorder %s40, %s41
      %p55 = scmp.eq.s32.totalorder %s33, 1
      %p56 = por %p54, %p55
      %p58 = scmp.ne.s32.totalorder %s41, %s57
      %p59 = scmp.eq.s32.totalorder %s33, 0
      %p60 = por %p58, %p59
      %s62 = sadd.s32 %s61, 1
      %p65 = scmp.eq.s32.totalorder %s27, 1
      %p66 = scmp.ne.s32.totalorder %s61, %s63
      %p67 = scmp.eq.s32.totalorder %s27, 0
      %p68 = por %p66, %p67
      %p69 = scmp.ne.s32.totalorder %s61, %s63
      %p70 = scmp.eq.s32.totalorder %s32, 1
      %p71 = por %p69, %p70
      %p72 = scmp.ne.s32.totalorder %s63, %s64
      %p73 = scmp.eq.s32.totalorder %s32, 0
      %p74 = por %p72, %p73
      %p75 = scmp.ne.s32.totalorder %s63, %s64
      %p76 = scmp.eq.s32.totalorder %s33, 1
      %p77 = por %p75, %p76
      %p79 = scmp.ne.s32.totalorder %s64, %s78
      %p80 = scmp.eq.s32.totalorder %s33, 0
      %p81 = por %p79, %p80
      %s83 = sadd.s32 %s82, 1
      %p86 = scmp.eq.s32.totalorder %s27, 1
      %p87 = scmp.ne.s32.totalorder %s82, %s84
      %p88 = scmp.eq.s32.totalorder %s27, 0
      %p89 = por %p87, %p88
      %p90 = scmp.ne.s32.totalorder %s82, %s84
      %p91 = scmp.eq.s32.totalorder %s32, 1
      %p92 = por %p90, %p91
      %p93 = scmp.ne.s32.totalorder %s84, %s85
      %p94 = scmp.eq.s32.totalorder %s32, 0
      %p95 = por %p93, %p94
      %p96 = scmp.ne.s32.totalorder %s84, %s85
      %p97 = scmp.eq.s32.totalorder %s33, 1
      %p98 = por %p96, %p97
      %p100 = scmp.ne.s32.totalorder %s85, %s99
      %p101 = scmp.eq.s32.totalorder %s33, 0
      %p102 = por %p100, %p101
      %s104 = sadd.s32 %s103, 1
      %p107 = scmp.eq.s32.totalorder %s27, 1
      %p108 = scmp.ne.s32.totalorder %s103, %s105
      %p109 = scmp.eq.s32.totalorder %s27, 0
      %p110 = por %p108, %p109
      %p111 = scmp.ne.s32.totalorder %s103, %s105
      %p112 = scmp.eq.s32.totalorder %s32, 1
      %p113 = por %p111, %p112
      %p114 = scmp.ne.s32.totalorder %s105, %s106
      %p115 = scmp.eq.s32.totalorder %s32, 0
      %p116 = por %p114, %p115
      %p117 = scmp.ne.s32.totalorder %s105, %s106
      %p118 = scmp.eq.s32.totalorder %s33, 1
      %p119 = por %p117, %p118
      %p121 = scmp.ne.s32.totalorder %s106, %s120
      %p122 = scmp.eq.s32.totalorder %s33, 0
      %p123 = por %p121, %p122
      %s125 = sadd.s32 %s124, 1
      %p128 = scmp.eq.s32.totalorder %s27, 1
      %p129 = scmp.ne.s32.totalorder %s124, %s126
      %p130 = scmp.eq.s32.totalorder %s27, 0
      %p131 = por %p129, %p130
      %p132 = scmp.ne.s32.totalorder %s124, %s126
      %p133 = scmp.eq.s32.totalorder %s32, 1
      %p134 = por %p132, %p133
      %p135 = scmp.ne.s32.totalorder %s126, %s127
      %p136 = scmp.eq.s32.totalorder %s32, 0
      %p137 = por %p135, %p136
      %p138 = scmp.ne.s32.totalorder %s126, %s127
      %p139 = scmp.eq.s32.totalorder %s33, 1
      %p140 = por %p138, %p139
      %p142 = scmp.ne.s32.totalorder %s127, %s141
      %p143 = scmp.eq.s32.totalorder %s33, 0
      %p144 = por %p142, %p143
      %s146 = sadd.s32 %s145, 1
      %p149 = scmp.eq.s32.totalorder %s27, 1
      %p150 = scmp.ne.s32.totalorder %s145, %s147
      %p151 = scmp.eq.s32.totalorder %s27, 0
      %p152 = por %p150, %p151
      %p153 = scmp.ne.s32.totalorder %s145, %s147
      %p154 = scmp.eq.s32.totalorder %s32, 1
      %p155 = por %p153, %p154
      %p156 = scmp.ne.s32.totalorder %s147, %s148
      %p157 = scmp.eq.s32.totalorder %s32, 0
      %p158 = por %p156, %p157
      %p159 = scmp.ne.s32.totalorder %s147, %s148
      %p160 = scmp.eq.s32.totalorder %s33, 1
      %p161 = por %p159, %p160
      %p163 = scmp.ne.s32.totalorder %s148, %s162
      %p164 = scmp.eq.s32.totalorder %s33, 0
      %p165 = por %p163, %p164
      %s167 = sadd.s32 %s166, 1
      %p170 = scmp.eq.s32.totalorder %s27, 1
      %p171 = scmp.ne.s32.totalorder %s166, %s168
      %p172 = scmp.eq.s32.totalorder %s27, 0
      %p173 = por %p171, %p172
      %p174 = scmp.ne.s32.totalorder %s166, %s168
      %p175 = scmp.eq.s32.totalorder %s32, 1
      %p176 = por %p174, %p175
      %p177 = scmp.ne.s32.totalorder %s168, %s169
      %p178 = scmp.eq.s32.totalorder %s32, 0
      %p179 = por %p177, %p178
      %p180 = scmp.ne.s32.totalorder %s168, %s169
      %p181 = scmp.eq.s32.totalorder %s33, 1
      %p182 = por %p180, %p181
      %p184 = scmp.ne.s32.totalorder %s169, %s183
      %p185 = scmp.eq.s32.totalorder %s33, 0
      %p186 = por %p184, %p185
      %s188 = sadd.s32 %s187, 1
      %p191 = scmp.eq.s32.totalorder %s27, 1
      %p192 = scmp.ne.s32.totalorder %s187, %s189
      %p193 = scmp.eq.s32.totalorder %s27, 0
      %p194 = por %p192, %p193
      %p195 = scmp.ne.s32.totalorder %s187, %s189
      %p196 = scmp.eq.s32.totalorder %s32, 1
      %p197 = por %p195, %p196
      %p198 = scmp.ne.s32.totalorder %s189, %s190
      %p199 = scmp.eq.s32.totalorder %s32, 0
      %p200 = por %p198, %p199
      %p201 = scmp.ne.s32.totalorder %s189, %s190
      %p202 = scmp.eq.s32.totalorder %s33, 1
      %p203 = por %p201, %p202
      %p205 = scmp.ne.s32.totalorder %s190, %s204
      %p206 = scmp.eq.s32.totalorder %s33, 0
      %p207 = por %p205, %p206
      %s209 = sadd.s32 %s208, 1
      %p212 = scmp.eq.s32.totalorder %s27, 1
      %p213 = scmp.ne.s32.totalorder %s208, %s210
      %p214 = scmp.eq.s32.totalorder %s27, 0
      %p215 = por %p213, %p214
      %p216 = scmp.ne.s32.totalorder %s208, %s210
      %p217 = scmp.eq.s32.totalorder %s32, 1
      %p218 = por %p216, %p217
      %p219 = scmp.ne.s32.totalorder %s210, %s211
      %p220 = scmp.eq.s32.totalorder %s32, 0
      %p221 = por %p219, %p220
      %p222 = scmp.ne.s32.totalorder %s210, %s211
      %p223 = scmp.eq.s32.totalorder %s33, 1
      %p224 = por %p222, %p223
      %p226 = scmp.ne.s32.totalorder %s211, %s225
      %p227 = scmp.eq.s32.totalorder %s33, 0
      %p228 = por %p226, %p227
      %s230 = sadd.s32 %s229, 1
      %p233 = scmp.eq.s32.totalorder %s27, 1
      %p234 = scmp.ne.s32.totalorder %s229, %s231
      %p235 = scmp.eq.s32.totalorder %s27, 0
      %p236 = por %p234, %p235
      %p237 = scmp.ne.s32.totalorder %s229, %s231
      %p238 = scmp.eq.s32.totalorder %s32, 1
      %p239 = por %p237, %p238
      %p240 = scmp.ne.s32.totalorder %s231, %s232
      %p241 = scmp.eq.s32.totalorder %s32, 0
      %p242 = por %p240, %p241
      %p243 = scmp.ne.s32.totalorder %s231, %s232
      %p244 = scmp.eq.s32.totalorder %s33, 1
      %p245 = por %p243, %p244
      %p247 = scmp.ne.s32.totalorder %s232, %s246
      %p248 = scmp.eq.s32.totalorder %s33, 0
      %p249 = por %p247, %p248
      %s251 = sadd.s32 %s250, 1
      %p254 = scmp.eq.s32.totalorder %s27, 1
      %p255 = scmp.ne.s32.totalorder %s250, %s252
      %p256 = scmp.eq.s32.totalorder %s27, 0
      %p257 = por %p255, %p256
      %p258 = scmp.ne.s32.totalorder %s250, %s252
      %p259 = scmp.eq.s32.totalorder %s32, 1
      %p260 = por %p258, %p259
      %p261 = scmp.ne.s32.totalorder %s252, %s253
      %p262 = scmp.eq.s32.totalorder %s32, 0
      %p263 = por %p261, %p262
      %p264 = scmp.ne.s32.totalorder %s252, %s253
      %p265 = scmp.eq.s32.totalorder %s33, 1
      %p266 = por %p264, %p265
      %p268 = scmp.ne.s32.totalorder %s253, %s267
      %p269 = scmp.eq.s32.totalorder %s33, 0
      %p270 = por %p268, %p269
      %s272 = sadd.s32 %s271, 1
      %p275 = scmp.eq.s32.totalorder %s27, 1
      %p276 = scmp.ne.s32.totalorder %s271, %s273
      %p277 = scmp.eq.s32.totalorder %s27, 0
      %p278 = por %p276, %p277
      %p279 = scmp.ne.s32.totalorder %s271, %s273
      %p280 = scmp.eq.s32.totalorder %s32, 1
      %p281 = por %p279, %p280
      %p282 = scmp.ne.s32.totalorder %s273, %s274
      %p283 = scmp.eq.s32.totalorder %s32, 0
      %p284 = por %p282, %p283
      %p285 = scmp.ne.s32.totalorder %s273, %s274
      %p286 = scmp.eq.s32.totalorder %s33, 1
      %p287 = por %p285, %p286
      %p289 = scmp.ne.s32.totalorder %s274, %s288
      %p290 = scmp.eq.s32.totalorder %s33, 0
      %p291 = por %p289, %p290
      %s293 = sadd.s32 %s292, 1
      %p296 = scmp.eq.s32.totalorder %s27, 1
      %p297 = scmp.ne.s32.totalorder %s292, %s294
      %p298 = scmp.eq.s32.totalorder %s27, 0
      %p299 = por %p297, %p298
      %p300 = scmp.ne.s32.totalorder %s292, %s294
      %p301 = scmp.eq.s32.totalorder %s32, 1
      %p302 = por %p300, %p301
      %p303 = scmp.ne.s32.totalorder %s294, %s295
      %p304 = scmp.eq.s32.totalorder %s32, 0
      %p305 = por %p303, %p304
      %p306 = scmp.ne.s32.totalorder %s294, %s295
      %p307 = scmp.eq.s32.totalorder %s33, 1
      %p308 = por %p306, %p307
      %p310 = scmp.ne.s32.totalorder %s295, %s309
      %p311 = scmp.eq.s32.totalorder %s33, 0
      %p312 = por %p310, %p311
      %s313 = ssub.s32 %s27, %s34
      %p314 = scmp.eq.s32.totalorder %s313, 0
      %s316 = sadd.s32 %s315, 1
      %s317 = scalar_select %p314, %s315, %s316
      %p320 = pneg %p314
      %p321 = scmp.eq.s32.totalorder %s27, 1
      %p322 = por %p320, %p321
      %p323 = scmp.ne.s32.totalorder %s315, %s318
      %p324 = scmp.eq.s32.totalorder %s27, 0
      %p325 = por %p323, %p324
      %p326 = scmp.ne.s32.totalorder %s315, %s318
      %p327 = scmp.eq.s32.totalorder %s32, 1
      %p328 = por %p326, %p327
      %p329 = scmp.ne.s32.totalorder %s318, %s319
      %p330 = scmp.eq.s32.totalorder %s32, 0
      %p331 = por %p329, %p330
      %p332 = scmp.ne.s32.totalorder %s318, %s319
      %p333 = scmp.eq.s32.totalorder %s33, 1
      %p334 = por %p332, %p333
      %p336 = scmp.ne.s32.totalorder %s319, %s335
      %p337 = scmp.eq.s32.totalorder %s33, 0
      %p338 = por %p336, %p337
      %p339 = scmp.le.s32.totalorder 1, %s27
      %p340 = scmp.lt.s32.totalorder %s27, 3
      %p341 = pnand %p339, %p340
      %p342 = pneg %p341
      // Predicated region
      $region9: #{tpu_custom_call.1} parent=5 // pred_check
        _
      $region10: #{tpu_custom_call.1} parent=5 // pred_check_branch
        %344 = sbr.rel (%p341) target = $region12
      $region11: #{tpu_custom_call.1} parent=5 // pred_region
        %s345 = ssub.s32 %s27, 1
        // Predicated region
        $region13: #{tpu_custom_call.1} parent=11 // pred_check
          %p346 = pneg %p74
        $region14: #{tpu_custom_call.1} parent=11 // pred_check_branch
          %348 = sbr.rel (%p346) target = $region16
        $region15: #{tpu_custom_call.1} parent=11 // pred_region
          %s350 = ssub.s32 3072, 3072
          %351 = vsyncadd [#allocation7], %s350
          %s352 = sshll.u32 [#allocation6], 4
          %s353 = int_to_ptr.vmem [resolvable:$true] %s352
          %358 = dma.hbm_to_vmem [thread:$0]  %s1, 3072, %s353, [#allocation7], 192, 192, 12
        $region16: #{tpu_custom_call.1} parent=11 // pred_fallthru
          _
        // Predicated region
        $region17: #{tpu_custom_call.1} parent=11 // pred_check
          %p359 = pneg %p95
        $region18: #{tpu_custom_call.1} parent=11 // pred_check_branch
          %361 = sbr.rel (%p359) target = $region20
        $region19: #{tpu_custom_call.1} parent=11 // pred_region
          _
        $region20: #{tpu_custom_call.1} parent=11 // pred_fallthru
          _
        // Predicated region
        $region21: #{tpu_custom_call.1} parent=11 // pred_check
          %p362 = pneg %p116
        $region22: #{tpu_custom_call.1} parent=11 // pred_check_branch
          %364 = sbr.rel (%p362) target = $region24
        $region23: #{tpu_custom_call.1} parent=11 // pred_region
          %s366 = ssub.s32 1024, 1024
          %367 = vsyncadd [#allocation7], %s366
          %s368 = sshll.u32 [#allocation8], 4
          %s369 = int_to_ptr.vmem [resolvable:$true] %s368
          %374 = dma.hbm_to_vmem [thread:$0]  %s3, 1024, %s369, [#allocation7], 64, 64, 4
        $region24: #{tpu_custom_call.1} parent=11 // pred_fallthru
          _
        // Predicated region
        $region25: #{tpu_custom_call.1} parent=11 // pred_check
          %p375 = pneg %p137
        $region26: #{tpu_custom_call.1} parent=11 // pred_check_branch
          %377 = sbr.rel (%p375) target = $region28
        $region27: #{tpu_custom_call.1} parent=11 // pred_region
          _
        $region28: #{tpu_custom_call.1} parent=11 // pred_fallthru
          _
        // Predicated region
        $region29: #{tpu_custom_call.1} parent=11 // pred_check
          %p378 = pneg %p158
        $region30: #{tpu_custom_call.1} parent=11 // pred_check_branch
          %380 = sbr.rel (%p378) target = $region32
        $region31: #{tpu_custom_call.1} parent=11 // pred_region
          %s382 = ssub.s32 1024, 1024
          %383 = vsyncadd [#allocation10], %s382
          %s384 = sshll.u32 [#allocation9], 4
          %s385 = int_to_ptr.vmem [resolvable:$true] %s384
          %390 = dma.hbm_to_vmem [thread:$0]  %s5, 1024, %s385, [#allocation10], 64, 64, 4
        $region32: #{tpu_custom_call.1} parent=11 // pred_fallthru
          _
        // Predicated region
        $region33: #{tpu_custom_call.1} parent=11 // pred_check
          %p391 = pneg %p179
        $region34: #{tpu_custom_call.1} parent=11 // pred_check_branch
          %393 = sbr.rel (%p391) target = $region36
        $region35: #{tpu_custom_call.1} parent=11 // pred_region
          _
        $region36: #{tpu_custom_call.1} parent=11 // pred_fallthru
          _
        // Predicated region
        $region37: #{tpu_custom_call.1} parent=11 // pred_check
          %p394 = pneg %p200
        $region38: #{tpu_custom_call.1} parent=11 // pred_check_branch
          %396 = sbr.rel (%p394) target = $region40
        $region39: #{tpu_custom_call.1} parent=11 // pred_region
          %s398 = ssub.s32 1024, 1024
          %399 = vsyncadd [#allocation10], %s398
          %s400 = sshll.u32 [#allocation11], 4
          %s401 = int_to_ptr.vmem [resolvable:$true] %s400
          %406 = dma.hbm_to_vmem [thread:$0]  %s7, 1024, %s401, [#allocation10], 64, 64, 4
        $region40: #{tpu_custom_call.1} parent=11 // pred_fallthru
          _
        // Predicated region
        $region41: #{tpu_custom_call.1} parent=11 // pred_check
          %p407 = pneg %p221
        $region42: #{tpu_custom_call.1} parent=11 // pred_check_branch
          %409 = sbr.rel (%p407) target = $region44
        $region43: #{tpu_custom_call.1} parent=11 // pred_region
          _
        $region44: #{tpu_custom_call.1} parent=11 // pred_fallthru
          _
        // Predicated region
        $region45: #{tpu_custom_call.1} parent=11 // pred_check
          %p410 = pneg %p242
        $region46: #{tpu_custom_call.1} parent=11 // pred_check_branch
          %412 = sbr.rel (%p410) target = $region48
        $region47: #{tpu_custom_call.1} parent=11 // pred_region
          _
        $region48: #{tpu_custom_call.1} parent=11 // pred_fallthru
          _
        // Predicated region
        $region49: #{tpu_custom_call.1} parent=11 // pred_check
          %p413 = pneg %p263
        $region50: #{tpu_custom_call.1} parent=11 // pred_check_branch
          %415 = sbr.rel (%p413) target = $region52
        $region51: #{tpu_custom_call.1} parent=11 // pred_region
          _
        $region52: #{tpu_custom_call.1} parent=11 // pred_fallthru
          _
        // Predicated region
        $region53: #{tpu_custom_call.1} parent=11 // pred_check
          %p416 = pneg %p284
        $region54: #{tpu_custom_call.1} parent=11 // pred_check_branch
          %418 = sbr.rel (%p416) target = $region56
        $region55: #{tpu_custom_call.1} parent=11 // pred_region
          _
        $region56: #{tpu_custom_call.1} parent=11 // pred_fallthru
          _
        // Predicated region
        $region57: #{tpu_custom_call.1} parent=11 // pred_check
          %p419 = pneg %p305
        $region58: #{tpu_custom_call.1} parent=11 // pred_check_branch
          %421 = sbr.rel (%p419) target = $region60
        $region59: #{tpu_custom_call.1} parent=11 // pred_region
          _
        $region60: #{tpu_custom_call.1} parent=11 // pred_fallthru
          _
      $region12: #{tpu_custom_call.1} parent=5 // pred_fallthru
        _
      %p422 = scmp.lt.s32.totalorder %s27, 2
      // Predicated region
      $region61: #{tpu_custom_call.1} parent=5 // pred_check
        %p423 = pneg %p422
      $region62: #{tpu_custom_call.1} parent=5 // pred_check_branch
        %425 = sbr.rel (%p423) target = $region64
      $region63: #{tpu_custom_call.1} parent=5 // pred_region
        // Predicated region
        $region65: #{tpu_custom_call.1} parent=63 // pred_check
          %p426 = pneg %p47
        $region66: #{tpu_custom_call.1} parent=63 // pred_check_branch
          %428 = sbr.rel (%p426) target = $region68
        $region67: #{tpu_custom_call.1} parent=63 // pred_region
          %s429 = sand.u32 %s37, 1
          %s430 = scalar_lea.sflag [#allocation4], %s429
          %s431 = sand.u32 %s37, 1
          %s432 = smul.addr %s431, 8
          %s433 = scalar_lea.vmem [#allocation3], %s432
          %s435 = ssub.s32 128, 128
          %436 = vsyncadd %s430, %s435
          %s437 = smul.addr %s27, 128
          %s438 = scalar_lea.hbm %s0, %s437
          %s440 = sshll.u32 %s433, 4
          %s441 = int_to_ptr.vmem [resolvable:$true] %s440
          %443 = dma.hbm_to_vmem [thread:$0]  %s438, 128, %s441, %s430
        $region68: #{tpu_custom_call.1} parent=63 // pred_fallthru
          _
      $region64: #{tpu_custom_call.1} parent=5 // pred_fallthru
        _
      %p444 = scmp.le.s32.totalorder 1, %s27
      %p445 = scmp.lt.s32.totalorder %s27, 3
      %p446 = pnand %p444, %p445
      %p447 = pneg %p446
      // Predicated region
      $region69: #{tpu_custom_call.1} parent=5 // pred_check
        _
      $region70: #{tpu_custom_call.1} parent=5 // pred_check_branch
        %449 = sbr.rel (%p446) target = $region72
      $region71: #{tpu_custom_call.1} parent=5 // pred_region
        %s450 = ssub.s32 %s27, 1
        %s451 = sand.u32 %s40, 1
        %s452 = scalar_lea.sflag [#allocation4], %s451
        %s453 = sand.u32 %s40, 1
        %s454 = smul.addr %s453, 8
        %s455 = scalar_lea.vmem [#allocation3], %s454
        // Predicated region
        $region73: #{tpu_custom_call.1} parent=71 // pred_check
          %p456 = pneg %p53
        $region74: #{tpu_custom_call.1} parent=71 // pred_check_branch
          %458 = sbr.rel (%p456) target = $region76
        $region75: #{tpu_custom_call.1} parent=71 // pred_region
          %459 = dma.done %s452, 128
        $region76: #{tpu_custom_call.1} parent=71 // pred_fallthru
          _
        // Predicated region
        $region77: #{tpu_custom_call.1} parent=71 // pred_check
          %p460 = pneg %p74
        $region78: #{tpu_custom_call.1} parent=71 // pred_check_branch
          %462 = sbr.rel (%p460) target = $region80
        $region79: #{tpu_custom_call.1} parent=71 // pred_region
          %463 = dma.done [#allocation7], 3072
        $region80: #{tpu_custom_call.1} parent=71 // pred_fallthru
          _
        // Predicated region
        $region81: #{tpu_custom_call.1} parent=71 // pred_check
          %p464 = pneg %p116
        $region82: #{tpu_custom_call.1} parent=71 // pred_check_branch
          %466 = sbr.rel (%p464) target = $region84
        $region83: #{tpu_custom_call.1} parent=71 // pred_region
          %467 = dma.done [#allocation7], 1024
        $region84: #{tpu_custom_call.1} parent=71 // pred_fallthru
          _
        // Predicated region
        $region85: #{tpu_custom_call.1} parent=71 // pred_check
          %p468 = pneg %p158
        $region86: #{tpu_custom_call.1} parent=71 // pred_check_branch
          %470 = sbr.rel (%p468) target = $region88
        $region87: #{tpu_custom_call.1} parent=71 // pred_region
          %471 = dma.done [#allocation10], 1024
        $region88: #{tpu_custom_call.1} parent=71 // pred_fallthru
          _
        // Predicated region
        $region89: #{tpu_custom_call.1} parent=71 // pred_check
          %p472 = pneg %p200
        $region90: #{tpu_custom_call.1} parent=71 // pred_check_branch
          %474 = sbr.rel (%p472) target = $region92
        $region91: #{tpu_custom_call.1} parent=71 // pred_region
          %475 = dma.done [#allocation10], 1024
        $region92: #{tpu_custom_call.1} parent=71 // pred_fallthru
          _
        %s476 = sand.u32 %s40, 1
        %s477 = scalar_lea.sflag [#allocation4], %s476
        %s478 = sand.u32 %s40, 1
        %s479 = smul.addr %s478, 8
        %s480 = scalar_lea.vmem [#allocation3], %s479
        %p481 = pneg %p53
        %p482 = pneg %p50
        %p483 = pneg %p74
        %p484 = pneg %p71
        %p485 = pneg %p95
        %p486 = pneg %p92
        %p487 = pneg %p116
        %p488 = pneg %p113
        %p489 = pneg %p137
        %p490 = pneg %p134
        %p491 = pneg %p158
        %p492 = pneg %p155
        %p493 = pneg %p179
        %p494 = pneg %p176
        %p495 = pneg %p200
        %p496 = pneg %p197
        %p497 = pneg %p221
        %p498 = pneg %p218
        %p499 = pneg %p242
        %p500 = pneg %p239
        %p501 = pneg %p263
        %p502 = pneg %p260
        %p503 = pneg %p284
        %p504 = pneg %p281
        %p505 = pneg %p305
        %p506 = pneg %p302
        %p507 = pneg %p331
        %p508 = pneg %p328
        %s509 = sand.u32 %s318, 1
        %s510 = scalar_lea.sflag [#allocation5], %s509
        %s511 = sand.u32 %s318, 1
        %s512 = smul.addr %s511, 8
        %s513 = scalar_lea.vmem [#allocation12], %s512
        %v515 = vld [vmem:[%s455] sm:$0xff]
        %v516 = vpack.c.bf16 %v515, %v515
        %v517 = vld [vmem:[#allocation6] sm:$0xff]
        %v518 = vld [vmem:[#allocation6 + $0x8] sm:$0xf]
        %v519 = vld [vmem:[#allocation6 + $0xc] sm:$0xff]
        %v520 = vld [vmem:[#allocation6 + $0x14] sm:$0xf]
        %v521 = vld [vmem:[#allocation6 + $0x18] sm:$0xff]
        %v522 = vld [vmem:[#allocation6 + $0x20] sm:$0xf]
        %v523 = vld [vmem:[#allocation6 + $0x24] sm:$0xff]
        %v524 = vld [vmem:[#allocation6 + $0x2c] sm:$0xf]
        %v525 = vld [vmem:[#allocation6 + $0x30] sm:$0xff]
        %v526 = vld [vmem:[#allocation6 + $0x38] sm:$0xf]
        %v527 = vld [vmem:[#allocation6 + $0x3c] sm:$0xff]
        %v528 = vld [vmem:[#allocation6 + $0x44] sm:$0xf]
        %v529 = vld [vmem:[#allocation6 + $0x48] sm:$0xff]
        %v530 = vld [vmem:[#allocation6 + $0x50] sm:$0xf]
        %v531 = vld [vmem:[#allocation6 + $0x54] sm:$0xff]
        %v532 = vld [vmem:[#allocation6 + $0x5c] sm:$0xf]
        %v533 = vld [vmem:[#allocation6 + $0x60] sm:$0xff]
        %v534 = vld [vmem:[#allocation6 + $0x68] sm:$0xf]
        %v535 = vld [vmem:[#allocation6 + $0x6c] sm:$0xff]
        %v536 = vld [vmem:[#allocation6 + $0x74] sm:$0xf]
        %v537 = vld [vmem:[#allocation6 + $0x78] sm:$0xff]
        %v538 = vld [vmem:[#allocation6 + $0x80] sm:$0xf]
        %v539 = vld [vmem:[#allocation6 + $0x84] sm:$0xff]
        %v540 = vld [vmem:[#allocation6 + $0x8c] sm:$0xf]
        %v541 = vld [vmem:[#allocation6 + $0x90] sm:$0xff]
        %v542 = vld [vmem:[#allocation6 + $0x98] sm:$0xf]
        %v543 = vld [vmem:[#allocation6 + $0x9c] sm:$0xff]
        %v544 = vld [vmem:[#allocation6 + $0xa4] sm:$0xf]
        %v545 = vld [vmem:[#allocation6 + $0xa8] sm:$0xff]
        %v546 = vld [vmem:[#allocation6 + $0xb0] sm:$0xf]
        %v547 = vld [vmem:[#allocation6 + $0xb4] sm:$0xff]
        %v548 = vld [vmem:[#allocation6 + $0xbc] sm:$0xf]
        %v549 = vld [vmem:[%s2] sm:$0x7]
        %v551 = vlaneseq
        %v552 = vshrl.u32 %v551, 7
        %v553 = vsub.s32 0, %v552
        %v554 = vrot.slane %v549, %v553
        %v555 = vlaneseq
        %v556 = vshrl.u32 %v555, 7
        %v557 = vsub.s32 1, %v556
        %v558 = vrot.slane %v549, %v557
        %v559 = vlaneseq
        %v560 = vshrl.u32 %v559, 7
        %v561 = vsub.s32 2, %v560
        %v562 = vrot.slane %v549, %v561
        %v598 = vunpack.c.l.b16 %v517
        %v599 = vunpack.c.h.b16 %v517
        %v600 = vunpack.c.l.b16 %v518
        %v601 = vunpack.c.l.b16 %v519
        %v602 = vunpack.c.h.b16 %v519
        %v603 = vunpack.c.l.b16 %v520
        %v604 = vunpack.c.l.b16 %v521
        %v605 = vunpack.c.h.b16 %v521
        %v606 = vunpack.c.l.b16 %v522
        %v607 = vunpack.c.l.b16 %v523
        %v608 = vunpack.c.h.b16 %v523
        %v609 = vunpack.c.l.b16 %v524
        %v610 = vunpack.c.l.b16 %v525
        %v611 = vunpack.c.h.b16 %v525
        %v612 = vunpack.c.l.b16 %v526
        %v613 = vunpack.c.l.b16 %v527
        %v614 = vunpack.c.h.b16 %v527
        %v615 = vunpack.c.l.b16 %v528
        %v616 = vunpack.c.l.b16 %v529
        %v617 = vunpack.c.h.b16 %v529
        %v618 = vunpack.c.l.b16 %v530
        %v619 = vunpack.c.l.b16 %v531
        %v620 = vunpack.c.h.b16 %v531
        %v621 = vunpack.c.l.b16 %v532
        %v622 = vunpack.c.l.b16 %v533
        %v623 = vunpack.c.h.b16 %v533
        %v624 = vunpack.c.l.b16 %v534
        %v625 = vunpack.c.l.b16 %v535
        %v626 = vunpack.c.h.b16 %v535
        %v627 = vunpack.c.l.b16 %v536
        %v628 = vunpack.c.l.b16 %v537
        %v629 = vunpack.c.h.b16 %v537
        %v630 = vunpack.c.l.b16 %v538
        %v631 = vunpack.c.l.b16 %v539
        %v632 = vunpack.c.h.b16 %v539
        %v633 = vunpack.c.l.b16 %v540
        %v634 = vunpack.c.l.b16 %v541
        %v635 = vunpack.c.h.b16 %v541
        %v636 = vunpack.c.l.b16 %v542
        %v637 = vunpack.c.l.b16 %v543
        %v638 = vunpack.c.h.b16 %v543
        %v639 = vunpack.c.l.b16 %v544
        %v640 = vunpack.c.l.b16 %v545
        %v641 = vunpack.c.h.b16 %v545
        %v642 = vunpack.c.l.b16 %v546
        %v643 = vunpack.c.l.b16 %v547
        %v644 = vunpack.c.h.b16 %v547
        %v645 = vunpack.c.l.b16 %v548
        %v646 = vpack.c.b16 %v601, %v598
        %v647 = vpack.c.b16 %v602, %v599
        %v648 = vpack.c.b16 %v603, %v600
        %v649 = vpack.c.b16 %v607, %v604
        %v650 = vpack.c.b16 %v608, %v605
        %v651 = vpack.c.b16 %v609, %v606
        %v652 = vpack.c.b16 %v613, %v610
        %v653 = vpack.c.b16 %v614, %v611
        %v654 = vpack.c.b16 %v615, %v612
        %v655 = vpack.c.b16 %v619, %v616
        %v656 = vpack.c.b16 %v620, %v617
        %v657 = vpack.c.b16 %v621, %v618
        %v658 = vpack.c.b16 %v625, %v622
        %v659 = vpack.c.b16 %v626, %v623
        %v660 = vpack.c.b16 %v627, %v624
        %v661 = vpack.c.b16 %v631, %v628
        %v662 = vpack.c.b16 %v632, %v629
        %v663 = vpack.c.b16 %v633, %v630
        %v664 = vpack.c.b16 %v637, %v634
        %v665 = vpack.c.b16 %v638, %v635
        %v666 = vpack.c.b16 %v639, %v636
        %v667 = vpack.c.b16 %v643, %v640
        %v668 = vpack.c.b16 %v644, %v641
        %v669 = vpack.c.b16 %v645, %v642
        %694 = vmatprep.subr.bf16.mxu0 %v647
        %695 = vmatpush1.bf16.msra.mxu0 %v646
        %696 = vmatprep.subr.bf16.mxu0 %v650
        %697 = vmatpush1.bf16.msra.mxu0 %v649
        %698 = vmatprep.subr.bf16.mxu0 %v653
        %699 = vmatpush1.bf16.msra.mxu0 %v652
        %700 = vmatprep.subr.bf16.mxu0 %v656
        %701 = vmatpush1.bf16.msra.mxu0 %v655
        %702 = vmatprep.subr.bf16.mxu0 %v659
        %703 = vmatpush1.bf16.msra.mxu0 %v658
        %704 = vmatprep.subr.bf16.mxu0 %v662
        %705 = vmatpush1.bf16.msra.mxu0 %v661
        %706 = vmatprep.subr.bf16.mxu0 %v665
        %707 = vmatpush1.bf16.msra.mxu0 %v664
        %708 = vmatprep.subr.bf16.mxu0 %v668
        %709 = vmatpush1.bf16.msra.mxu0 %v667
        %710 = vmatprep.subr.bf16.mxu0 0
        %711 = vmatpush1.bf16.msra.mxu0 0
        %712 = vmatprep.subr.bf16.mxu0 0
        %713 = vmatpush1.bf16.msra.mxu0 0
        %714 = vmatprep.subr.bf16.mxu0 0
        %715 = vmatpush1.bf16.msra.mxu0 0
        %716 = vmatprep.subr.bf16.mxu0 0
        %717 = vmatpush1.bf16.msra.mxu0 0
        %718 = vmatprep.subr.bf16.mxu0 0
        %719 = vmatpush1.bf16.msra.mxu0 0
        %720 = vmatprep.subr.bf16.mxu0 0
        %721 = vmatpush1.bf16.msra.mxu0 0
        %722 = vmatprep.subr.bf16.mxu0 0
        %723 = vmatpush1.bf16.msra.mxu0 0
        %724 = vmatprep.subr.bf16.mxu0 0
        %725 = vmatpush1.bf16.msra.mxu0 0
        %726 = vmatprep.mubr.bf16.mxu0 0
        %727 = vmatmul.mubr.bf16.gmra.mrb[0].mxu0 %v516
        %v728 = vpop.f32.mrb[0].mxu0
        %v729 = vadd.f32 %v554, %v728
        %v730 = vpop.f32.mrb[0].mxu0
        %v731 = vadd.f32 %v558, %v730
        %v732 = vpop.f32.mrb[0].mxu0
        %v733 = vpop.f32.mrb[0].mxu0
        %734 = vdwg.mxu0
        %735 = vmatprep.subr.bf16.mxu0 0
        %736 = vmatpush1.bf16.msra.mxu0 %v648
        %737 = vmatprep.subr.bf16.mxu0 0
        %738 = vmatpush1.bf16.msra.mxu0 %v651
        %739 = vmatprep.subr.bf16.mxu0 0
        %740 = vmatpush1.bf16.msra.mxu0 %v654
        %741 = vmatprep.subr.bf16.mxu0 0
        %742 = vmatpush1.bf16.msra.mxu0 %v657
        %743 = vmatprep.subr.bf16.mxu0 0
        %744 = vmatpush1.bf16.msra.mxu0 %v660
        %745 = vmatprep.subr.bf16.mxu0 0
        %746 = vmatpush1.bf16.msra.mxu0 %v663
        %747 = vmatprep.subr.bf16.mxu0 0
        %748 = vmatpush1.bf16.msra.mxu0 %v666
        %749 = vmatprep.subr.bf16.mxu0 0
        %750 = vmatpush1.bf16.msra.mxu0 %v669
        %751 = vmatprep.subr.bf16.mxu0 0
        %752 = vmatpush1.bf16.msra.mxu0 0
        %753 = vmatprep.subr.bf16.mxu0 0
        %754 = vmatpush1.bf16.msra.mxu0 0
        %755 = vmatprep.subr.bf16.mxu0 0
        %756 = vmatpush1.bf16.msra.mxu0 0
        %757 = vmatprep.subr.bf16.mxu0 0
        %758 = vmatpush1.bf16.msra.mxu0 0
        %759 = vmatprep.subr.bf16.mxu0 0
        %760 = vmatpush1.bf16.msra.mxu0 0
        %761 = vmatprep.subr.bf16.mxu0 0
        %762 = vmatpush1.bf16.msra.mxu0 0
        %763 = vmatprep.subr.bf16.mxu0 0
        %764 = vmatpush1.bf16.msra.mxu0 0
        %765 = vmatprep.subr.bf16.mxu0 0
        %766 = vmatpush1.bf16.msra.mxu0 0
        %767 = vmatprep.mubr.bf16.mxu0 0
        %768 = vmatmul.mubr.bf16.gmra.mrb[0].mxu0 %v516
        %v769 = vpop.f32.mrb[0].mxu0
        %v770 = vadd.f32 %v562, %v769
        %v771 = vpop.f32.mrb[0].mxu0
        %v772 = vpop.f32.mrb[0].mxu0
        %v773 = vpop.f32.mrb[0].mxu0
        %774 = vdwg.mxu0
        %v775 = vpack.c.bf16 %v729, %v729
        %v776 = vpack.c.bf16 %v731, %v731
        %v777 = vpack.c.bf16 %v770, %v770
        %vm778 = vcmask 523264
        %v780 = vsel %vm778, %v775, 0
        %v783 = vsel %vm778, %v776, 0
        %785 = vmatprep.subr.bf16.mxu0 0
        %786 = vmatpush1.bf16.xpose.msra.mxu0 %v783
        %787 = vmatprep.subr.bf16.mxu0 0
        %788 = vmatpush1.bf16.xpose.msra.mxu0 0
        %789 = vmatprep.subr.bf16.mxu0 0
        %790 = vmatpush1.bf16.xpose.msra.mxu0 0
        %791 = vmatprep.subr.bf16.mxu0 0
        %792 = vmatpush1.bf16.xpose.msra.mxu0 0
        %793 = vmatprep.subr.bf16.mxu0 0
        %794 = vmatpush1.bf16.xpose.msra.mxu0 0
        %795 = vmatprep.subr.bf16.mxu0 0
        %796 = vmatpush1.bf16.xpose.msra.mxu0 0
        %797 = vmatprep.subr.bf16.mxu0 0
        %798 = vmatpush1.bf16.xpose.msra.mxu0 0
        %799 = vmatprep.subr.bf16.mxu0 0
        %800 = vmatpush1.bf16.xpose.msra.mxu0 0
        %801 = vmatprep.subr.bf16.mxu0 0
        %802 = vmatpush1.bf16.xpose.msra.mxu0 0
        %803 = vmatprep.subr.bf16.mxu0 0
        %804 = vmatpush1.bf16.xpose.msra.mxu0 0
        %805 = vmatprep.subr.bf16.mxu0 0
        %806 = vmatpush1.bf16.xpose.msra.mxu0 0
        %807 = vmatprep.subr.bf16.mxu0 0
        %808 = vmatpush1.bf16.xpose.msra.mxu0 0
        %809 = vmatprep.subr.bf16.mxu0 0
        %810 = vmatpush1.bf16.xpose.msra.mxu0 0
        %811 = vmatprep.subr.bf16.mxu0 0
        %812 = vmatpush1.bf16.xpose.msra.mxu0 0
        %813 = vmatprep.subr.bf16.mxu0 0
        %814 = vmatpush1.bf16.xpose.msra.mxu0 0
        %815 = vmatprep.subr.bf16.mxu0 0
        %816 = vmatpush1.bf16.xpose.msra.mxu0 0
        %817 = vmatprep.mubr.bf16.mxu0 0
        %818 = vmatmul.mubr.bf16.gmra.mrb[0].mxu0 %v780
        %v819 = vpop.f32.mrb[0].mxu0
        %v820 = vadd.f32 0.0, %v819
        %v821 = vpop.f32.mrb[0].mxu0
        %v822 = vpop.f32.mrb[0].mxu0
        %v823 = vpop.f32.mrb[0].mxu0
        %824 = vdwg.mxu0
        %vm825 = vcmask 64512
        %v826 = vsel %vm825, %v820, -inf
        %827 = vmax.xlane.f32.xlu0 %v826
        %v828 = vpop.xlane.xlu0 %827
        %v829 = vsub.f32 %v820, %v828
        %v830 = vmul.f32 %v829, 1.442695
        %v831 = vpow.pop %v830
        %v832 = vsel %vm825, %v831, 0.0
        %833 = vadd.xlane.f32.xlu0 %v832
        %v834 = vpop.xlane.xlu0 %833
        %v835 = vrcp.pop %v834
        %v836 = vmul.f32 %v831, %v835
        %v837 = vpack.c.bf16 %v836, %v836
        %v839 = vsel %vm825, %v837, 0
        %vm841 = vcmask 1043456
        %v843 = vsel %vm841, %v777, 0
        %845 = vmatprep.subr.bf16.mxu0 0
        %846 = vmatpush1.bf16.msra.mxu0 %v843
        %847 = vmatprep.subr.bf16.mxu0 0
        %848 = vmatpush1.bf16.msra.mxu0 0
        %849 = vmatprep.subr.bf16.mxu0 0
        %850 = vmatpush1.bf16.msra.mxu0 0
        %851 = vmatprep.subr.bf16.mxu0 0
        %852 = vmatpush1.bf16.msra.mxu0 0
        %853 = vmatprep.subr.bf16.mxu0 0
        %854 = vmatpush1.bf16.msra.mxu0 0
        %855 = vmatprep.subr.bf16.mxu0 0
        %856 = vmatpush1.bf16.msra.mxu0 0
        %857 = vmatprep.subr.bf16.mxu0 0
        %858 = vmatpush1.bf16.msra.mxu0 0
        %859 = vmatprep.subr.bf16.mxu0 0
        %860 = vmatpush1.bf16.msra.mxu0 0
        %861 = vmatprep.subr.bf16.mxu0 0
        %862 = vmatpush1.bf16.msra.mxu0 0
        %863 = vmatprep.subr.bf16.mxu0 0
        %864 = vmatpush1.bf16.msra.mxu0 0
        %865 = vmatprep.subr.bf16.mxu0 0
        %866 = vmatpush1.bf16.msra.mxu0 0
        %867 = vmatprep.subr.bf16.mxu0 0
        %868 = vmatpush1.bf16.msra.mxu0 0
        %869 = vmatprep.subr.bf16.mxu0 0
        %870 = vmatpush1.bf16.msra.mxu0 0
        %871 = vmatprep.subr.bf16.mxu0 0
        %872 = vmatpush1.bf16.msra.mxu0 0
        %873 = vmatprep.subr.bf16.mxu0 0
        %874 = vmatpush1.bf16.msra.mxu0 0
        %875 = vmatprep.subr.bf16.mxu0 0
        %876 = vmatpush1.bf16.msra.mxu0 0
        %877 = vmatprep.mubr.bf16.mxu0 0
        %878 = vmatmul.mubr.bf16.gmra.mrb[0].mxu0 %v839
        %v879 = vpop.f32.mrb[0].mxu0
        %v880 = vadd.f32 0.0, %v879
        %v881 = vpop.f32.mrb[0].mxu0
        %v882 = vpop.f32.mrb[0].mxu0
        %v883 = vpop.f32.mrb[0].mxu0
        %884 = vdwg.mxu0
        %885 = vst.msk [vmem:[#allocation2] sm:$0xff] %vm778, %v880
        %887 = vrot.lane.b32.xlu0 %v775, 64
        %v888 = vpop.permute.xlu0 %887
        %890 = vrot.lane.b32.xlu0 %v776, 64
        %v891 = vpop.permute.xlu0 %890
        %v893 = vsel %vm778, %v888, 0
        %v896 = vsel %vm778, %v891, 0
        %898 = vmatprep.subr.bf16.mxu0 0
        %899 = vmatpush1.bf16.xpose.msra.mxu0 %v896
        %900 = vmatprep.subr.bf16.mxu0 0
        %901 = vmatpush1.bf16.xpose.msra.mxu0 0
        %902 = vmatprep.subr.bf16.mxu0 0
        %903 = vmatpush1.bf16.xpose.msra.mxu0 0
        %904 = vmatprep.subr.bf16.mxu0 0
        %905 = vmatpush1.bf16.xpose.msra.mxu0 0
        %906 = vmatprep.subr.bf16.mxu0 0
        %907 = vmatpush1.bf16.xpose.msra.mxu0 0
        %908 = vmatprep.subr.bf16.mxu0 0
        %909 = vmatpush1.bf16.xpose.msra.mxu0 0
        %910 = vmatprep.subr.bf16.mxu0 0
        %911 = vmatpush1.bf16.xpose.msra.mxu0 0
        %912 = vmatprep.subr.bf16.mxu0 0
        %913 = vmatpush1.bf16.xpose.msra.mxu0 0
        %914 = vmatprep.subr.bf16.mxu0 0
        %915 = vmatpush1.bf16.xpose.msra.mxu0 0
        %916 = vmatprep.subr.bf16.mxu0 0
        %917 = vmatpush1.bf16.xpose.msra.mxu0 0
        %918 = vmatprep.subr.bf16.mxu0 0
        %919 = vmatpush1.bf16.xpose.msra.mxu0 0
        %920 = vmatprep.subr.bf16.mxu0 0
        %921 = vmatpush1.bf16.xpose.msra.mxu0 0
        %922 = vmatprep.subr.bf16.mxu0 0
        %923 = vmatpush1.bf16.xpose.msra.mxu0 0
        %924 = vmatprep.subr.bf16.mxu0 0
        %925 = vmatpush1.bf16.xpose.msra.mxu0 0
        %926 = vmatprep.subr.bf16.mxu0 0
        %927 = vmatpush1.bf16.xpose.msra.mxu0 0
        %928 = vmatprep.subr.bf16.mxu0 0
        %929 = vmatpush1.bf16.xpose.msra.mxu0 0
        %930 = vmatprep.mubr.bf16.mxu0 0
        %931 = vmatmul.mubr.bf16.gmra.mrb[0].mxu0 %v893
        %v932 = vpop.f32.mrb[0].mxu0
        %v933 = vadd.f32 0.0, %v932
        %v934 = vpop.f32.mrb[0].mxu0
        %v935 = vpop.f32.mrb[0].mxu0
        %v936 = vpop.f32.mrb[0].mxu0
        %937 = vdwg.mxu0
        %v938 = vsel %vm825, %v933, -inf
        %939 = vmax.xlane.f32.xlu0 %v938
        %v940 = vpop.xlane.xlu0 %939
        %v941 = vsub.f32 %v933, %v940
        %v942 = vmul.f32 %v941, 1.442695
        %v943 = vpow.pop %v942
        %v944 = vsel %vm825, %v943, 0.0
        %945 = vadd.xlane.f32.xlu0 %v944
        %v946 = vpop.xlane.xlu0 %945
        %v947 = vrcp.pop %v946
        %v948 = vmul.f32 %v943, %v947
        %v949 = vpack.c.bf16 %v948, %v948
        %951 = vrot.lane.b32.xlu0 %v777, 64
        %v952 = vpop.permute.xlu0 %951
        %v954 = vsel %vm825, %v949, 0
        %v957 = vsel %vm841, %v952, 0
        %959 = vmatprep.subr.bf16.mxu0 0
        %960 = vmatpush1.bf16.msra.mxu0 %v957
        %961 = vmatprep.subr.bf16.mxu0 0
        %962 = vmatpush1.bf16.msra.mxu0 0
        %963 = vmatprep.subr.bf16.mxu0 0
        %964 = vmatpush1.bf16.msra.mxu0 0
        %965 = vmatprep.subr.bf16.mxu0 0
        %966 = vmatpush1.bf16.msra.mxu0 0
        %967 = vmatprep.subr.bf16.mxu0 0
        %968 = vmatpush1.bf16.msra.mxu0 0
        %969 = vmatprep.subr.bf16.mxu0 0
        %970 = vmatpush1.bf16.msra.mxu0 0
        %971 = vmatprep.subr.bf16.mxu0 0
        %972 = vmatpush1.bf16.msra.mxu0 0
        %973 = vmatprep.subr.bf16.mxu0 0
        %974 = vmatpush1.bf16.msra.mxu0 0
        %975 = vmatprep.subr.bf16.mxu0 0
        %976 = vmatpush1.bf16.msra.mxu0 0
        %977 = vmatprep.subr.bf16.mxu0 0
        %978 = vmatpush1.bf16.msra.mxu0 0
        %979 = vmatprep.subr.bf16.mxu0 0
        %980 = vmatpush1.bf16.msra.mxu0 0
        %981 = vmatprep.subr.bf16.mxu0 0
        %982 = vmatpush1.bf16.msra.mxu0 0
        %983 = vmatprep.subr.bf16.mxu0 0
        %984 = vmatpush1.bf16.msra.mxu0 0
        %985 = vmatprep.subr.bf16.mxu0 0
        %986 = vmatpush1.bf16.msra.mxu0 0
        %987 = vmatprep.subr.bf16.mxu0 0
        %988 = vmatpush1.bf16.msra.mxu0 0
        %989 = vmatprep.subr.bf16.mxu0 0
        %990 = vmatpush1.bf16.msra.mxu0 0
        %991 = vmatprep.mubr.bf16.mxu0 0
        %992 = vmatmul.mubr.bf16.gmra.mrb[0].mxu0 %v954
        %v993 = vpop.f32.mrb[0].mxu0
        %v994 = vadd.f32 0.0, %v993
        %v995 = vpop.f32.mrb[0].mxu0
        %v996 = vpop.f32.mrb[0].mxu0
        %v997 = vpop.f32.mrb[0].mxu0
        %998 = vdwg.mxu0
        %1000 = vrot.lane.b32.xlu0 %v994, 64
        %v1001 = vpop.permute.xlu0 %1000
        %vm1003 = vcmask 1048064
        %1004 = vst.msk [vmem:[#allocation2] sm:$0xff] %vm1003, %v1001
        %v1005 = vld [vmem:[#allocation2] sm:$0xff]
        %v1006 = vpack.c.bf16 %v1005, %v1005
        %v1007 = vld [vmem:[#allocation8] sm:$0xf]
        %v1008 = vld [vmem:[#allocation8 + $0x4] sm:$0xf]
        %v1009 = vld [vmem:[#allocation8 + $0x8] sm:$0xf]
        %v1010 = vld [vmem:[#allocation8 + $0xc] sm:$0xf]
        %v1011 = vld [vmem:[#allocation8 + $0x10] sm:$0xf]
        %v1012 = vld [vmem:[#allocation8 + $0x14] sm:$0xf]
        %v1013 = vld [vmem:[#allocation8 + $0x18] sm:$0xf]
        %v1014 = vld [vmem:[#allocation8 + $0x1c] sm:$0xf]
        %v1015 = vld [vmem:[#allocation8 + $0x20] sm:$0xf]
        %v1016 = vld [vmem:[#allocation8 + $0x24] sm:$0xf]
        %v1017 = vld [vmem:[#allocation8 + $0x28] sm:$0xf]
        %v1018 = vld [vmem:[#allocation8 + $0x2c] sm:$0xf]
        %v1019 = vld [vmem:[#allocation8 + $0x30] sm:$0xf]
        %v1020 = vld [vmem:[#allocation8 + $0x34] sm:$0xf]
        %v1021 = vld [vmem:[#allocation8 + $0x38] sm:$0xf]
        %v1022 = vld [vmem:[#allocation8 + $0x3c] sm:$0xf]
        %v1023 = vld [vmem:[%s4] sm:$0x1]
        %v1025 = vlaneseq
        %v1026 = vshrl.u32 %v1025, 7
        %v1027 = vsub.s32 0, %v1026
        %v1028 = vrot.slane %v1023, %v1027
        %v1046 = vunpack.c.l.b16 %v1007
        %v1047 = vunpack.c.l.b16 %v1008
        %v1048 = vunpack.c.l.b16 %v1009
        %v1049 = vunpack.c.l.b16 %v1010
        %v1050 = vunpack.c.l.b16 %v1011
        %v1051 = vunpack.c.l.b16 %v1012
        %v1052 = vunpack.c.l.b16 %v1013
        %v1053 = vunpack.c.l.b16 %v1014
        %v1054 = vunpack.c.l.b16 %v1015
        %v1055 = vunpack.c.l.b16 %v1016
        %v1056 = vunpack.c.l.b16 %v1017
        %v1057 = vunpack.c.l.b16 %v1018
        %v1058 = vunpack.c.l.b16 %v1019
        %v1059 = vunpack.c.l.b16 %v1020
        %v1060 = vunpack.c.l.b16 %v1021
        %v1061 = vunpack.c.l.b16 %v1022
        %v1062 = vpack.c.b16 %v1047, %v1046
        %v1063 = vpack.c.b16 %v1049, %v1048
        %v1064 = vpack.c.b16 %v1051, %v1050
        %v1065 = vpack.c.b16 %v1053, %v1052
        %v1066 = vpack.c.b16 %v1055, %v1054
        %v1067 = vpack.c.b16 %v1057, %v1056
        %v1068 = vpack.c.b16 %v1059, %v1058
        %v1069 = vpack.c.b16 %v1061, %v1060
        %1078 = vmatprep.subr.bf16.mxu0 0
        %1079 = vmatpush1.bf16.msra.mxu0 %v1062
        %1080 = vmatprep.subr.bf16.mxu0 0
        %1081 = vmatpush1.bf16.msra.mxu0 %v1063
        %1082 = vmatprep.subr.bf16.mxu0 0
        %1083 = vmatpush1.bf16.msra.mxu0 %v1064
        %1084 = vmatprep.subr.bf16.mxu0 0
        %1085 = vmatpush1.bf16.msra.mxu0 %v1065
        %1086 = vmatprep.subr.bf16.mxu0 0
        %1087 = vmatpush1.bf16.msra.mxu0 %v1066
        %1088 = vmatprep.subr.bf16.mxu0 0
        %1089 = vmatpush1.bf16.msra.mxu0 %v1067
        %1090 = vmatprep.subr.bf16.mxu0 0
        %1091 = vmatpush1.bf16.msra.mxu0 %v1068
        %1092 = vmatprep.subr.bf16.mxu0 0
        %1093 = vmatpush1.bf16.msra.mxu0 %v1069
        %1094 = vmatprep.subr.bf16.mxu0 0
        %1095 = vmatpush1.bf16.msra.mxu0 0
        %1096 = vmatprep.subr.bf16.mxu0 0
        %1097 = vmatpush1.bf16.msra.mxu0 0
        %1098 = vmatprep.subr.bf16.mxu0 0
        %1099 = vmatpush1.bf16.msra.mxu0 0
        %1100 = vmatprep.subr.bf16.mxu0 0
        %1101 = vmatpush1.bf16.msra.mxu0 0
        %1102 = vmatprep.subr.bf16.mxu0 0
        %1103 = vmatpush1.bf16.msra.mxu0 0
        %1104 = vmatprep.subr.bf16.mxu0 0
        %1105 = vmatpush1.bf16.msra.mxu0 0
        %1106 = vmatprep.subr.bf16.mxu0 0
        %1107 = vmatpush1.bf16.msra.mxu0 0
        %1108 = vmatprep.subr.bf16.mxu0 0
        %1109 = vmatpush1.bf16.msra.mxu0 0
        %1110 = vmatprep.mubr.bf16.mxu0 0
        %1111 = vmatmul.mubr.bf16.gmra.mrb[0].mxu0 %v1006
        %v1112 = vpop.f32.mrb[0].mxu0
        %v1113 = vadd.f32 %v1028, %v1112
        %v1114 = vpop.f32.mrb[0].mxu0
        %v1115 = vpop.f32.mrb[0].mxu0
        %v1116 = vpop.f32.mrb[0].mxu0
        %1117 = vdwg.mxu0
        %v1118 = vadd.f32 %v1113, %v515
        %1119 = vadd.xlane.f32.xlu0 %v1118
        %v1120 = vpop.xlane.xlu0 %1119
        %v1121 = vrcp.pop 128.0
        %v1122 = vmul.f32 %v1120, %v1121
        %v1123 = vsub.f32 %v1118, %v1122
        %v1124 = vmul.f32 %v1123, %v1123
        %1125 = vadd.xlane.f32.xlu0 %v1124
        %v1126 = vpop.xlane.xlu0 %1125
        %v1127 = vmul.f32 %v1126, %v1121
        %v1128 = vadd.f32 %v1127, 1e-06
        %v1129 = vrsqrt.pop %v1128
        %v1130 = vmul.f32 %v1123, %v1129
        %v1131 = vld [vmem:[%s9] sm:$0x1]
        %v1133 = vlaneseq
        %v1134 = vshrl.u32 %v1133, 7
        %v1135 = vsub.s32 0, %v1134
        %v1136 = vrot.slane %v1131, %v1135
        %v1138 = vmul.f32 %v1130, %v1136
        %v1139 = vld [vmem:[%s10] sm:$0x1]
        %v1141 = vlaneseq
        %v1142 = vshrl.u32 %v1141, 7
        %v1143 = vsub.s32 0, %v1142
        %v1144 = vrot.slane %v1139, %v1143
        %v1146 = vadd.f32 %v1138, %v1144
        %v1147 = vpack.c.bf16 %v1146, %v1146
        %v1148 = vld [vmem:[#allocation9] sm:$0xf]
        %v1149 = vld [vmem:[#allocation9 + $0x4] sm:$0xf]
        %v1150 = vld [vmem:[#allocation9 + $0x8] sm:$0xf]
        %v1151 = vld [vmem:[#allocation9 + $0xc] sm:$0xf]
        %v1152 = vld [vmem:[#allocation9 + $0x10] sm:$0xf]
        %v1153 = vld [vmem:[#allocation9 + $0x14] sm:$0xf]
        %v1154 = vld [vmem:[#allocation9 + $0x18] sm:$0xf]
        %v1155 = vld [vmem:[#allocation9 + $0x1c] sm:$0xf]
        %v1156 = vld [vmem:[#allocation9 + $0x20] sm:$0xf]
        %v1157 = vld [vmem:[#allocation9 + $0x24] sm:$0xf]
        %v1158 = vld [vmem:[#allocation9 + $0x28] sm:$0xf]
        %v1159 = vld [vmem:[#allocation9 + $0x2c] sm:$0xf]
        %v1160 = vld [vmem:[#allocation9 + $0x30] sm:$0xf]
        %v1161 = vld [vmem:[#allocation9 + $0x34] sm:$0xf]
        %v1162 = vld [vmem:[#allocation9 + $0x38] sm:$0xf]
        %v1163 = vld [vmem:[#allocation9 + $0x3c] sm:$0xf]
        %v1164 = vld [vmem:[%s6] sm:$0x1]
        %v1166 = vlaneseq
        %v1167 = vshrl.u32 %v1166, 7
        %v1168 = vsub.s32 0, %v1167
        %v1169 = vrot.slane %v1164, %v1168
        %v1187 = vunpack.c.l.b16 %v1148
        %v1188 = vunpack.c.l.b16 %v1149
        %v1189 = vunpack.c.l.b16 %v1150
        %v1190 = vunpack.c.l.b16 %v1151
        %v1191 = vunpack.c.l.b16 %v1152
        %v1192 = vunpack.c.l.b16 %v1153
        %v1193 = vunpack.c.l.b16 %v1154
        %v1194 = vunpack.c.l.b16 %v1155
        %v1195 = vunpack.c.l.b16 %v1156
        %v1196 = vunpack.c.l.b16 %v1157
        %v1197 = vunpack.c.l.b16 %v1158
        %v1198 = vunpack.c.l.b16 %v1159
        %v1199 = vunpack.c.l.b16 %v1160
        %v1200 = vunpack.c.l.b16 %v1161
        %v1201 = vunpack.c.l.b16 %v1162
        %v1202 = vunpack.c.l.b16 %v1163
        %v1203 = vpack.c.b16 %v1188, %v1187
        %v1204 = vpack.c.b16 %v1190, %v1189
        %v1205 = vpack.c.b16 %v1192, %v1191
        %v1206 = vpack.c.b16 %v1194, %v1193
        %v1207 = vpack.c.b16 %v1196, %v1195
        %v1208 = vpack.c.b16 %v1198, %v1197
        %v1209 = vpack.c.b16 %v1200, %v1199
        %v1210 = vpack.c.b16 %v1202, %v1201
        %1219 = vmatprep.subr.bf16.mxu0 0
        %1220 = vmatpush1.bf16.msra.mxu0 %v1203
        %1221 = vmatprep.subr.bf16.mxu0 0
        %1222 = vmatpush1.bf16.msra.mxu0 %v1204
        %1223 = vmatprep.subr.bf16.mxu0 0
        %1224 = vmatpush1.bf16.msra.mxu0 %v1205
        %1225 = vmatprep.subr.bf16.mxu0 0
        %1226 = vmatpush1.bf16.msra.mxu0 %v1206
        %1227 = vmatprep.subr.bf16.mxu0 0
        %1228 = vmatpush1.bf16.msra.mxu0 %v1207
        %1229 = vmatprep.subr.bf16.mxu0 0
        %1230 = vmatpush1.bf16.msra.mxu0 %v1208
        %1231 = vmatprep.subr.bf16.mxu0 0
        %1232 = vmatpush1.bf16.msra.mxu0 %v1209
        %1233 = vmatprep.subr.bf16.mxu0 0
        %1234 = vmatpush1.bf16.msra.mxu0 %v1210
        %1235 = vmatprep.subr.bf16.mxu0 0
        %1236 = vmatpush1.bf16.msra.mxu0 0
        %1237 = vmatprep.subr.bf16.mxu0 0
        %1238 = vmatpush1.bf16.msra.mxu0 0
        %1239 = vmatprep.subr.bf16.mxu0 0
        %1240 = vmatpush1.bf16.msra.mxu0 0
        %1241 = vmatprep.subr.bf16.mxu0 0
        %1242 = vmatpush1.bf16.msra.mxu0 0
        %1243 = vmatprep.subr.bf16.mxu0 0
        %1244 = vmatpush1.bf16.msra.mxu0 0
        %1245 = vmatprep.subr.bf16.mxu0 0
        %1246 = vmatpush1.bf16.msra.mxu0 0
        %1247 = vmatprep.subr.bf16.mxu0 0
        %1248 = vmatpush1.bf16.msra.mxu0 0
        %1249 = vmatprep.subr.bf16.mxu0 0
        %1250 = vmatpush1.bf16.msra.mxu0 0
        %1251 = vmatprep.mubr.bf16.mxu0 0
        %1252 = vmatmul.mubr.bf16.gmra.mrb[0].mxu0 %v1147
        %v1253 = vpop.f32.mrb[0].mxu0
        %v1254 = vadd.f32 %v1169, %v1253
        %v1255 = vpop.f32.mrb[0].mxu0
        %v1256 = vpop.f32.mrb[0].mxu0
        %v1257 = vpop.f32.mrb[0].mxu0
        %1258 = vdwg.mxu0
        %v1259 = vmax.f32 %v1254, 0.0
        %v1260 = vpack.c.bf16 %v1259, %v1259
        %v1261 = vld [vmem:[#allocation11] sm:$0xf]
        %v1262 = vld [vmem:[#allocation11 + $0x4] sm:$0xf]
        %v1263 = vld [vmem:[#allocation11 + $0x8] sm:$0xf]
        %v1264 = vld [vmem:[#allocation11 + $0xc] sm:$0xf]
        %v1265 = vld [vmem:[#allocation11 + $0x10] sm:$0xf]
        %v1266 = vld [vmem:[#allocation11 + $0x14] sm:$0xf]
        %v1267 = vld [vmem:[#allocation11 + $0x18] sm:$0xf]
        %v1268 = vld [vmem:[#allocation11 + $0x1c] sm:$0xf]
        %v1269 = vld [vmem:[#allocation11 + $0x20] sm:$0xf]
        %v1270 = vld [vmem:[#allocation11 + $0x24] sm:$0xf]
        %v1271 = vld [vmem:[#allocation11 + $0x28] sm:$0xf]
        %v1272 = vld [vmem:[#allocation11 + $0x2c] sm:$0xf]
        %v1273 = vld [vmem:[#allocation11 + $0x30] sm:$0xf]
        %v1274 = vld [vmem:[#allocation11 + $0x34] sm:$0xf]
        %v1275 = vld [vmem:[#allocation11 + $0x38] sm:$0xf]
        %v1276 = vld [vmem:[#allocation11 + $0x3c] sm:$0xf]
        %v1277 = vld [vmem:[%s8] sm:$0x1]
        %v1279 = vlaneseq
        %v1280 = vshrl.u32 %v1279, 7
        %v1281 = vsub.s32 0, %v1280
        %v1282 = vrot.slane %v1277, %v1281
        %v1300 = vunpack.c.l.b16 %v1261
        %v1301 = vunpack.c.l.b16 %v1262
        %v1302 = vunpack.c.l.b16 %v1263
        %v1303 = vunpack.c.l.b16 %v1264
        %v1304 = vunpack.c.l.b16 %v1265
        %v1305 = vunpack.c.l.b16 %v1266
        %v1306 = vunpack.c.l.b16 %v1267
        %v1307 = vunpack.c.l.b16 %v1268
        %v1308 = vunpack.c.l.b16 %v1269
        %v1309 = vunpack.c.l.b16 %v1270
        %v1310 = vunpack.c.l.b16 %v1271
        %v1311 = vunpack.c.l.b16 %v1272
        %v1312 = vunpack.c.l.b16 %v1273
        %v1313 = vunpack.c.l.b16 %v1274
        %v1314 = vunpack.c.l.b16 %v1275
        %v1315 = vunpack.c.l.b16 %v1276
        %v1316 = vpack.c.b16 %v1301, %v1300
        %v1317 = vpack.c.b16 %v1303, %v1302
        %v1318 = vpack.c.b16 %v1305, %v1304
        %v1319 = vpack.c.b16 %v1307, %v1306
        %v1320 = vpack.c.b16 %v1309, %v1308
        %v1321 = vpack.c.b16 %v1311, %v1310
        %v1322 = vpack.c.b16 %v1313, %v1312
        %v1323 = vpack.c.b16 %v1315, %v1314
        %1332 = vmatprep.subr.bf16.mxu0 0
        %1333 = vmatpush1.bf16.msra.mxu0 %v1316
        %1334 = vmatprep.subr.bf16.mxu0 0
        %1335 = vmatpush1.bf16.msra.mxu0 %v1317
        %1336 = vmatprep.subr.bf16.mxu0 0
        %1337 = vmatpush1.bf16.msra.mxu0 %v1318
        %1338 = vmatprep.subr.bf16.mxu0 0
        %1339 = vmatpush1.bf16.msra.mxu0 %v1319
        %1340 = vmatprep.subr.bf16.mxu0 0
        %1341 = vmatpush1.bf16.msra.mxu0 %v1320
        %1342 = vmatprep.subr.bf16.mxu0 0
        %1343 = vmatpush1.bf16.msra.mxu0 %v1321
        %1344 = vmatprep.subr.bf16.mxu0 0
        %1345 = vmatpush1.bf16.msra.mxu0 %v1322
        %1346 = vmatprep.subr.bf16.mxu0 0
        %1347 = vmatpush1.bf16.msra.mxu0 %v1323
        %1348 = vmatprep.subr.bf16.mxu0 0
        %1349 = vmatpush1.bf16.msra.mxu0 0
        %1350 = vmatprep.subr.bf16.mxu0 0
        %1351 = vmatpush1.bf16.msra.mxu0 0
        %1352 = vmatprep.subr.bf16.mxu0 0
        %1353 = vmatpush1.bf16.msra.mxu0 0
        %1354 = vmatprep.subr.bf16.mxu0 0
        %1355 = vmatpush1.bf16.msra.mxu0 0
        %1356 = vmatprep.subr.bf16.mxu0 0
        %1357 = vmatpush1.bf16.msra.mxu0 0
        %1358 = vmatprep.subr.bf16.mxu0 0
        %1359 = vmatpush1.bf16.msra.mxu0 0
        %1360 = vmatprep.subr.bf16.mxu0 0
        %1361 = vmatpush1.bf16.msra.mxu0 0
        %1362 = vmatprep.subr.bf16.mxu0 0
        %1363 = vmatpush1.bf16.msra.mxu0 0
        %1364 = vmatprep.mubr.bf16.mxu0 0
        %1365 = vmatmul.mubr.bf16.gmra.mrb[0].mxu0 %v1260
        %v1366 = vpop.f32.mrb[0].mxu0
        %v1367 = vadd.f32 %v1282, %v1366
        %v1368 = vpop.f32.mrb[0].mxu0
        %v1369 = vpop.f32.mrb[0].mxu0
        %v1370 = vpop.f32.mrb[0].mxu0
        %1371 = vdwg.mxu0
        %v1372 = vadd.f32 %v1146, %v1367
        %1373 = vadd.xlane.f32.xlu0 %v1372
        %v1374 = vpop.xlane.xlu0 %1373
        %v1375 = vmul.f32 %v1374, %v1121
        %v1376 = vsub.f32 %v1372, %v1375
        %v1377 = vmul.f32 %v1376, %v1376
        %1378 = vadd.xlane.f32.xlu0 %v1377
        %v1379 = vpop.xlane.xlu0 %1378
        %v1380 = vmul.f32 %v1379, %v1121
        %v1381 = vadd.f32 %v1380, 1e-06
        %v1382 = vrsqrt.pop %v1381
        %v1383 = vmul.f32 %v1376, %v1382
        %v1384 = vld [vmem:[%s11] sm:$0x1]
        %v1386 = vlaneseq
        %v1387 = vshrl.u32 %v1386, 7
        %v1388 = vsub.s32 0, %v1387
        %v1389 = vrot.slane %v1384, %v1388
        %v1391 = vmul.f32 %v1383, %v1389
        %v1392 = vld [vmem:[%s12] sm:$0x1]
        %v1394 = vlaneseq
        %v1395 = vshrl.u32 %v1394, 7
        %v1396 = vsub.s32 0, %v1395
        %v1397 = vrot.slane %v1392, %v1396
        %v1399 = vadd.f32 %v1391, %v1397
        %1400 = vst [vmem:[%s513] sm:$0xff] %v1399
        %s1401 = sand.u32 %s318, 1
        %s1402 = scalar_lea.sflag [#allocation5], %s1401
        %s1403 = sand.u32 %s318, 1
        %s1404 = smul.addr %s1403, 8
        %s1405 = scalar_lea.vmem [#allocation12], %s1404
        // Predicated region
        $region93: #{tpu_custom_call.1} parent=71 // pred_check
          %p1406 = pneg %p328
        $region94: #{tpu_custom_call.1} parent=71 // pred_check_branch
          %1408 = sbr.rel (%p1406) target = $region96
        $region95: #{tpu_custom_call.1} parent=71 // pred_region
          %s1410 = ssub.s32 128, 128
          %1411 = vsyncadd %s1402, %s1410
          %s1412 = smul.addr %s32, 128
          %s1413 = scalar_lea.hbm %s13, %s1412
          %s1415 = sshll.u32 %s1405, 4
          %s1416 = int_to_ptr.vmem [resolvable:$true] %s1415
          %1418 = dma.vmem_to_hbm [thread:$0]  %s1416, 128, %s1413, %s1402
        $region96: #{tpu_custom_call.1} parent=71 // pred_fallthru
          _
      $region72: #{tpu_custom_call.1} parent=5 // pred_fallthru
        _
      %p1419 = scmp.le.s32.totalorder 2, %s27
      // Predicated region
      $region97: #{tpu_custom_call.1} parent=5 // pred_check
        %p1420 = pneg %p1419
      $region98: #{tpu_custom_call.1} parent=5 // pred_check_branch
        %1422 = sbr.rel (%p1420) target = $region100
      $region99: #{tpu_custom_call.1} parent=5 // pred_region
        %s1423 = ssub.s32 %s27, 2
        // Predicated region
        $region101: #{tpu_custom_call.1} parent=99 // pred_check
          %p1424 = pneg %p334
        $region102: #{tpu_custom_call.1} parent=99 // pred_check_branch
          %1426 = sbr.rel (%p1424) target = $region104
        $region103: #{tpu_custom_call.1} parent=99 // pred_region
          %s1427 = sand.u32 %s319, 1
          %s1428 = scalar_lea.sflag [#allocation5], %s1427
          %s1429 = sand.u32 %s319, 1
          %s1430 = smul.addr %s1429, 8
          %s1431 = scalar_lea.vmem [#allocation12], %s1430
          %1432 = dma.done %s1428, 128
        $region104: #{tpu_custom_call.1} parent=99 // pred_fallthru
          _
      $region100: #{tpu_custom_call.1} parent=5 // pred_fallthru
        _
    $region6: #{tpu_custom_call.1} parent=1 // loop_footer
      %s31 = sadd.s32 1, %s27
    $region7: #{tpu_custom_call.1} parent=1 // loop_footer_branch
      %26 = sbr.rel target = $region3
    $region8: #{tpu_custom_call.1} parent=1 // loop_exit
      _
    %1433 = vsyncpa [#allocation4], 1
    %s1434 = scalar_lea.sflag [#allocation4], 1
    %1435 = vsyncpa %s1434, 1
    %1436 = vsyncpa [#allocation7], 1
    %1437 = vsyncpa [#allocation10], 1
    %1438 = vsyncpa [#allocation5], 1
    %s1439 = scalar_lea.sflag [#allocation5], 1
    %1440 = vsyncpa %s1439, 1

</llo_original>
